<compile_context>
chip_gen: v7x
topology: tpu7x:2x2x1
jax: 0.10.0
libtpu: 0.0.40
codegen_flags: <defaults>
</compile_context>

<pallas_src>
import functools

import jax
import jax.numpy as jnp
from jax.experimental import pallas as pl
from jax.experimental.pallas import tpu as pltpu


# ----------------------------------------------------------------------------
# Helpers
# ----------------------------------------------------------------------------
def _round_up(x, m):
    return ((x + m - 1) // m) * m


def _pick_row_tile(n):
    for t in (512, 256, 128):
        if n % t == 0:
            return t
    return n  # small N: single full block (still satisfies (8,128) rule)


def _pick_batch_tile(bp):
    for t in (64, 32, 16, 8):
        if bp % t == 0:
            return t
    return bp


# ----------------------------------------------------------------------------
# Pallas kernels
# ----------------------------------------------------------------------------
def _linear_kernel(x_ref, w_ref, b_ref, o_ref):
    """o = x @ W + b on one row-tile. x/W are bf16, accumulate + bias in f32."""
    o_ref[...] = (
        jnp.dot(x_ref[...], w_ref[...], preferred_element_type=jnp.float32)
        + b_ref[...]
    )


def _rnn_recurrence_kernel(xp_ref, whh_ref, out_ref, h_ref, *, unroll):
    """Elman recurrence over all T steps for one batch tile.

    xp_ref : (T, Bt, Hp) f32   precomputed x_t @ W_ih^T + (b_ih + b_hh)
    whh_ref: (Hp, Hp)    bf16  W_hh^T (pre-transposed)
    out_ref: (T, Bt, Hp) bf16  hidden sequence
    h_ref  : (Bt, Hp)    f32   VMEM hidden-state accumulator

    h_t = tanh(xp_t + h_{t-1} @ W_hh^T)
    """
    h_ref[...] = jnp.zeros_like(h_ref)  # h0 = zeros for this batch tile
    n_steps = xp_ref.shape[0]

    def step(t, carry):
        h_prev = h_ref[...]
        pre = xp_ref[t] + jnp.dot(
            h_prev.astype(jnp.bfloat16), whh_ref[...],
            preferred_element_type=jnp.float32,
        )
        h_new = jnp.tanh(pre)
        h_ref[...] = h_new
        out_ref[t] = h_new.astype(out_ref.dtype)
        return carry

    jax.lax.fori_loop(0, n_steps, step, 0, unroll=unroll)


# ----------------------------------------------------------------------------
# pallas_call wrappers
# ----------------------------------------------------------------------------
def linear(x, w, b):
    """x: (N, K) bf16, w: (K, M) bf16, b: (1, M) f32 -> (N, M) f32. Tiled over N."""
    N, K = x.shape
    M = w.shape[1]
    row_tile = _pick_row_tile(N)
    return pl.pallas_call(
        _linear_kernel,
        out_shape=jax.ShapeDtypeStruct((N, M), jnp.float32),
        grid=(N // row_tile,),
        in_specs=[
            pl.BlockSpec((row_tile, K), lambda i: (i, 0)),
            pl.BlockSpec((K, M), lambda i: (0, 0)),
            pl.BlockSpec((1, M), lambda i: (0, 0)),
        ],
        out_specs=pl.BlockSpec((row_tile, M), lambda i: (i, 0)),
        compiler_params=pltpu.CompilerParams(
            dimension_semantics=("parallel",),
            vmem_limit_bytes=64 * 1024 * 1024,
        ),
    )(x, w, b)


def rnn_recurrence(xp, w_hh_t):
    """xp: (T, Bp, Hp) f32, w_hh_t: (Hp, Hp) bf16 -> hidden seq (T, Bp, Hp) bf16."""
    T, Bp, Hp = xp.shape
    b_tile = _pick_batch_tile(Bp)
    kernel = functools.partial(_rnn_recurrence_kernel, unroll=bool(T <= 64))
    return pl.pallas_call(
        kernel,
        out_shape=jax.ShapeDtypeStruct((T, Bp, Hp), jnp.bfloat16),
        grid=(Bp // b_tile,),
        in_specs=[
            pl.BlockSpec((T, b_tile, Hp), lambda b: (0, b, 0)),
            pl.BlockSpec((Hp, Hp), lambda b: (0, 0)),
        ],
        out_specs=pl.BlockSpec((T, b_tile, Hp), lambda b: (0, b, 0)),
        scratch_shapes=[pltpu.VMEM((b_tile, Hp), jnp.float32)],
        compiler_params=pltpu.CompilerParams(
            # batch tiles are independent -> megacore sharding on v7x
            dimension_semantics=("parallel",),
            vmem_limit_bytes=64 * 1024 * 1024,
        ),
    )(xp, w_hh_t)


# ----------------------------------------------------------------------------
# Parameter handling
# ----------------------------------------------------------------------------
def init_params(key, vocab_size, embedding_dim, hidden_size, num_classes,
                num_layers):
    """Logical (PyTorch-shaped) f32 parameters."""
    params = {}
    k_emb, key = jax.random.split(key)
    params["embedding"] = jax.random.normal(
        k_emb, (vocab_size, embedding_dim), dtype=jnp.float32)
    bound = 1.0 / float(hidden_size) ** 0.5
    for layer in range(num_layers):
        in_dim = embedding_dim if layer == 0 else hidden_size
        k1, k2, k3, k4, key = jax.random.split(key, 5)
        params[f"w_ih_l{layer}"] = jax.random.uniform(
            k1, (hidden_size, in_dim), minval=-bound, maxval=bound,
            dtype=jnp.float32)
        params[f"w_hh_l{layer}"] = jax.random.uniform(
            k2, (hidden_size, hidden_size), minval=-bound, maxval=bound,
            dtype=jnp.float32)
        params[f"b_ih_l{layer}"] = jax.random.uniform(
            k3, (hidden_size,), minval=-bound, maxval=bound, dtype=jnp.float32)
        params[f"b_hh_l{layer}"] = jax.random.uniform(
            k4, (hidden_size,), minval=-bound, maxval=bound, dtype=jnp.float32)
    k5, k6, key = jax.random.split(key, 3)
    params["fc_w"] = jax.random.uniform(
        k5, (num_classes, hidden_size), minval=-bound, maxval=bound,
        dtype=jnp.float32)
    params["fc_b"] = jax.random.uniform(
        k6, (num_classes,), minval=-bound, maxval=bound, dtype=jnp.float32)
    return params


def prepare_params(params, num_layers):
    """One-time prep: pre-transpose, zero-pad feature dims to 128, cast to bf16.

    Zero padding is inert: padded hidden units have zero weights/bias, so they
    stay exactly 0 through tanh and never affect real outputs.
    """
    E = params["embedding"].shape[1]
    H = params["w_hh_l0"].shape[0]
    C = params["fc_w"].shape[0]
    Ep, Hp, Cp = _round_up(E, 128), _round_up(H, 128), _round_up(C, 128)

    prepped = {}
    prepped["embedding"] = jnp.pad(
        params["embedding"].astype(jnp.bfloat16), ((0, 0), (0, Ep - E)))
    for layer in range(num_layers):
        in_dim = E if layer == 0 else H
        in_p = Ep if layer == 0 else Hp
        w_ih_t = params[f"w_ih_l{layer}"].T            # (in, H)
        w_hh_t = params[f"w_hh_l{layer}"].T            # (H, H)
        bias = params[f"b_ih_l{layer}"] + params[f"b_hh_l{layer}"]
        prepped[f"w_ih_t_l{layer}"] = jnp.pad(
            w_ih_t, ((0, in_p - in_dim), (0, Hp - H))).astype(jnp.bfloat16)
        prepped[f"w_hh_t_l{layer}"] = jnp.pad(
            w_hh_t, ((0, Hp - H), (0, Hp - H))).astype(jnp.bfloat16)
        prepped[f"b_l{layer}"] = jnp.pad(
            bias, (0, Hp - H)).reshape(1, Hp).astype(jnp.float32)
    prepped["fc_w_t"] = jnp.pad(
        params["fc_w"].T, ((0, Hp - H), (0, Cp - C))).astype(jnp.bfloat16)
    prepped["fc_b"] = jnp.pad(
        params["fc_b"], (0, Cp - C)).reshape(1, Cp).astype(jnp.float32)
    return prepped


# ----------------------------------------------------------------------------
# Full forward pass
# ----------------------------------------------------------------------------
@functools.partial(jax.jit, static_argnames=("num_layers", "num_classes"))
def rnn_model_forward(tokens, prepped, num_layers, num_classes):
    B, T = tokens.shape
    Bp = _round_up(B, 8)

    # TODO(synk): embedding lookup is a data-dependent gather; kept in plain JAX
    # (jnp.take). Gathered directly time-major so no (B,T,E)->(T,B,E) transpose.
    x = jnp.take(prepped["embedding"], tokens.T, axis=0)      # (T, B, Ep) bf16
    if Bp != B:
        x = jnp.pad(x, ((0, 0), (0, Bp - B), (0, 0)))         # (T, Bp, Ep)

    for layer in range(num_layers):
        w_ih_t = prepped[f"w_ih_t_l{layer}"]                  # (in_p, Hp) bf16
        w_hh_t = prepped[f"w_hh_t_l{layer}"]                  # (Hp, Hp)   bf16
        bias = prepped[f"b_l{layer}"]                         # (1, Hp)    f32
        K = x.shape[-1]
        Hp = w_hh_t.shape[0]
        # Hoisted, time-parallel input projection: one big (T*Bp, K)@(K, Hp).
        xp = linear(x.reshape(T * Bp, K), w_ih_t, bias).reshape(T, Bp, Hp)
        # Serial part: only h @ W_hh^T + tanh per step, inside one pallas_call.
        x = rnn_recurrence(xp, w_hh_t)                        # (T, Bp, Hp) bf16

    Hp = x.shape[-1]
    logits = linear(x.reshape(T * Bp, Hp), prepped["fc_w_t"], prepped["fc_b"])
    Cp = logits.shape[-1]
    logits = logits.reshape(T, Bp, Cp)
    logits = jnp.transpose(logits, (1, 0, 2))                 # (Bp, T, Cp)
    return logits[:B, :, :num_classes]                        # (B, T, C)


# ----------------------------------------------------------------------------
# Pure-JAX reference mirroring the kernel math (bf16 matmuls, f32 accumulation)
# ----------------------------------------------------------------------------
def reference_forward(tokens, params, num_layers):
    bf16 = jnp.bfloat16
    x = jnp.take(params["embedding"], tokens.T, axis=0).astype(bf16)  # (T, B, E)
    B = tokens.shape[0]
    for layer in range(num_layers):
        w_ih_t = params[f"w_ih_l{layer}"].T.astype(bf16)
        w_hh_t = params[f"w_hh_l{layer}"].T.astype(bf16)
        bias = params[f"b_ih_l{layer}"] + params[f"b_hh_l{layer}"]
        xp = jnp.dot(x, w_ih_t, preferred_element_type=jnp.float32) + bias
        h0 = jnp.zeros((B, w_hh_t.shape[1]), jnp.float32)

        def step(h, xp_t, w_hh_t=w_hh_t):
            h_new = jnp.tanh(
                xp_t + jnp.dot(h.astype(bf16), w_hh_t,
                               preferred_element_type=jnp.float32))
            return h_new, h_new.astype(bf16)

        _, x = jax.lax.scan(step, h0, xp)                     # (T, B, H) bf16
    fc_w_t = params["fc_w"].T.astype(bf16)
    out = jnp.dot(x, fc_w_t, preferred_element_type=jnp.float32) + params["fc_b"]
    return jnp.transpose(out, (1, 0, 2))                      # (B, T, C)


if __name__ == "__main__":
    vocab_size, embedding_dim, hidden_size, num_classes = 20, 16, 32, 4
    num_layers = 1
    batch, seq_len = 2, 8

    key = jax.random.PRNGKey(0)
    k_tok, k_param = jax.random.split(key)
    tokens = jax.random.randint(k_tok, (batch, seq_len), 0, vocab_size,
                                dtype=jnp.int32)
    params = init_params(k_param, vocab_size, embedding_dim, hidden_size,
                         num_classes, num_layers)
    prepped = prepare_params(params, num_layers)

    out = rnn_model_forward(tokens, prepped, num_layers, num_classes)
    out = jax.block_until_ready(out)

    ref = reference_forward(tokens, params, num_layers)
    assert out.shape == (batch, seq_len, num_classes)
    assert jnp.allclose(out, ref, atol=5e-3, rtol=5e-3), "mismatch vs JAX reference"

    print("KERNEL_OK")
</pallas_src>

<mosaic_0001>
module attributes {stable_mosaic.version = 11 : i64} {
  func.func @_linear_kernel(%arg0: i32, %arg1: memref<64x128xbf16, #tpu.memory_space<vmem>>, %arg2: memref<128x128xbf16, #tpu.memory_space<vmem>>, %arg3: memref<1x128xf32, #tpu.memory_space<vmem>>, %arg4: memref<64x128xf32, #tpu.memory_space<vmem>>) attributes {dimension_semantics = [#tpu.dimension_semantics<parallel>], iteration_bounds = array<i64: 1>, scalar_prefetch = 0 : i64, scratch_operands = 0 : i64, tpu.core_type = #tpu.core_type<tc>, window_params = [{transform_indices = @transform_0, window_bounds = array<i64: 64, 128>}, {pipeline_mode = #tpu.pipeline_mode<synchronous>, transform_indices = @transform_1, window_bounds = array<i64: 128, 128>}, {pipeline_mode = #tpu.pipeline_mode<synchronous>, transform_indices = @transform_2, window_bounds = array<i64: 1, 128>}, {transform_indices = @transform_3, window_bounds = array<i64: 64, 128>}]} {
    %c0 = arith.constant 0 : index
    %c0_0 = arith.constant 0 : index
    %0 = vector.load %arg1[%c0, %c0_0] : memref<64x128xbf16, #tpu.memory_space<vmem>>, vector<64x128xbf16>
    %c0_1 = arith.constant 0 : index
    %c0_2 = arith.constant 0 : index
    %1 = vector.load %arg2[%c0_1, %c0_2] : memref<128x128xbf16, #tpu.memory_space<vmem>>, vector<128x128xbf16>
    %cst = arith.constant dense<0.000000e+00> : vector<64x128xf32>
    %2 = tpu.matmul %0, %1, %cst {dimension_numbers = #tpu.dot_dimension_numbers<[1], [0], [0], [1], [0, 0, 1, 1], [], []>} : vector<64x128xbf16>, vector<128x128xbf16>, vector<64x128xf32> -> vector<64x128xf32>
    %c0_3 = arith.constant 0 : index
    %c0_4 = arith.constant 0 : index
    %3 = vector.load %arg3[%c0_3, %c0_4] : memref<1x128xf32, #tpu.memory_space<vmem>>, vector<1x128xf32>
    %4 = vector.broadcast %3 : vector<1x128xf32> to vector<64x128xf32>
    %5 = arith.addf %2, %4 : vector<64x128xf32>
    %c0_5 = arith.constant 0 : index
    %c0_6 = arith.constant 0 : index
    %6 = vector.load %arg4[%c0_5, %c0_6] : memref<64x128xf32, #tpu.memory_space<vmem>>, vector<64x128xf32>
    tpu.vector_store %arg4[%c0_5, %c0_6], %5 {strides = array<i32>} : memref<64x128xf32, #tpu.memory_space<vmem>>, vector<64x128xf32>,
    return
  }
  func.func @transform_0(%arg0: i32) -> (i32, i32) {
    %c0_i32 = arith.constant 0 : i32
    %c0_i32_0 = arith.constant 0 : i32
    return %arg0, %c0_i32 : i32, i32
  }
  func.func @transform_1(%arg0: i32) -> (i32, i32) {
    %c0_i32 = arith.constant 0 : i32
    %c0_i32_0 = arith.constant 0 : i32
    %c0_i32_1 = arith.constant 0 : i32
    return %c0_i32, %c0_i32_0 : i32, i32
  }
  func.func @transform_2(%arg0: i32) -> (i32, i32) {
    %c0_i32 = arith.constant 0 : i32
    %c0_i32_0 = arith.constant 0 : i32
    %c0_i32_1 = arith.constant 0 : i32
    return %c0_i32, %c0_i32_0 : i32, i32
  }
  func.func @transform_3(%arg0: i32) -> (i32, i32) {
    %c0_i32 = arith.constant 0 : i32
    %c0_i32_0 = arith.constant 0 : i32
    return %arg0, %c0_i32 : i32, i32
  }
}

module attributes {stable_mosaic.version = 11 : i64} {
  func.func @_rnn_recurrence_kernel(%arg0: i32, %arg1: memref<8x8x128xf32, #tpu.memory_space<vmem>>, %arg2: memref<128x128xbf16, #tpu.memory_space<vmem>>, %arg3: memref<8x8x128xbf16, #tpu.memory_space<vmem>>, %arg4: memref<8x128xf32, #tpu.memory_space<vmem>>) attributes {dimension_semantics = [#tpu.dimension_semantics<parallel>], iteration_bounds = array<i64: 1>, scalar_prefetch = 0 : i64, scratch_operands = 1 : i64, tpu.core_type = #tpu.core_type<tc>, window_params = [{transform_indices = @transform_0, window_bounds = array<i64: 8, 8, 128>}, {pipeline_mode = #tpu.pipeline_mode<synchronous>, transform_indices = @transform_1, window_bounds = array<i64: 128, 128>}, {transform_indices = @transform_2, window_bounds = array<i64: 8, 8, 128>}]} {
    %cst = arith.constant 0.000000e+00 : f32
    %0 = vector.broadcast %cst : f32 to vector<8x128xf32>
    %c0 = arith.constant 0 : index
    %c0_0 = arith.constant 0 : index
    %1 = vector.load %arg4[%c0, %c0_0] : memref<8x128xf32, #tpu.memory_space<vmem>>, vector<8x128xf32>
    tpu.vector_store %arg4[%c0, %c0_0], %0 {strides = array<i32>} : memref<8x128xf32, #tpu.memory_space<vmem>>, vector<8x128xf32>,
    %c0_i32 = arith.constant 0 : i32
    %c0_1 = arith.constant 0 : index
    %c0_2 = arith.constant 0 : index
    %2 = vector.load %arg4[%c0_1, %c0_2] : memref<8x128xf32, #tpu.memory_space<vmem>>, vector<8x128xf32>
    %3 = arith.index_cast %c0_i32 : i32 to index
    %c0_3 = arith.constant 0 : index
    %c0_4 = arith.constant 0 : index
    %4 = vector.load %arg1[%3, %c0_3, %c0_4] : memref<8x8x128xf32, #tpu.memory_space<vmem>>, vector<1x8x128xf32>
    %5 = vector.shape_cast %4 : vector<1x8x128xf32> to vector<8x128xf32>
    %6 = arith.truncf %2 : vector<8x128xf32> to vector<8x128xbf16>
    %c0_5 = arith.constant 0 : index
    %c0_6 = arith.constant 0 : index
    %7 = vector.load %arg2[%c0_5, %c0_6] : memref<128x128xbf16, #tpu.memory_space<vmem>>, vector<128x128xbf16>
    %cst_7 = arith.constant dense<0.000000e+00> : vector<8x128xf32>
    %8 = tpu.matmul %6, %7, %cst_7 {dimension_numbers = #tpu.dot_dimension_numbers<[1], [0], [0], [1], [0, 0, 1, 1], [], []>} : vector<8x128xbf16>, vector<128x128xbf16>, vector<8x128xf32> -> vector<8x128xf32>
    %9 = arith.addf %5, %8 : vector<8x128xf32>
    %10 = math.tanh %9 : vector<8x128xf32>
    %c0_8 = arith.constant 0 : index
    %c0_9 = arith.constant 0 : index
    %11 = vector.load %arg4[%c0_8, %c0_9] : memref<8x128xf32, #tpu.memory_space<vmem>>, vector<8x128xf32>
    tpu.vector_store %arg4[%c0_8, %c0_9], %10 {strides = array<i32>} : memref<8x128xf32, #tpu.memory_space<vmem>>, vector<8x128xf32>,
    %12 = arith.truncf %10 : vector<8x128xf32> to vector<8x128xbf16>
    %13 = arith.index_cast %c0_i32 : i32 to index
    %c0_10 = arith.constant 0 : index
    %c0_11 = arith.constant 0 : index
    %14 = vector.load %arg3[%13, %c0_10, %c0_11] : memref<8x8x128xbf16, #tpu.memory_space<vmem>>, vector<1x8x128xbf16>
    %15 = vector.shape_cast %14 : vector<1x8x128xbf16> to vector<8x128xbf16>
    %16 = vector.shape_cast %12 : vector<8x128xbf16> to vector<1x8x128xbf16>
    tpu.vector_store %arg3[%13, %c0_10, %c0_11], %16 {strides = array<i32>} : memref<8x8x128xbf16, #tpu.memory_space<vmem>>, vector<1x8x128xbf16>,
    %c1_i32 = arith.constant 1 : i32
    %c0_12 = arith.constant 0 : index
    %c0_13 = arith.constant 0 : index
    %17 = vector.load %arg4[%c0_12, %c0_13] : memref<8x128xf32, #tpu.memory_space<vmem>>, vector<8x128xf32>
    %18 = arith.index_cast %c1_i32 : i32 to index
    %c0_14 = arith.constant 0 : index
    %c0_15 = arith.constant 0 : index
    %19 = vector.load %arg1[%18, %c0_14, %c0_15] : memref<8x8x128xf32, #tpu.memory_space<vmem>>, vector<1x8x128xf32>
    %20 = vector.shape_cast %19 : vector<1x8x128xf32> to vector<8x128xf32>
    %21 = arith.truncf %17 : vector<8x128xf32> to vector<8x128xbf16>
    %c0_16 = arith.constant 0 : index
    %c0_17 = arith.constant 0 : index
    %22 = vector.load %arg2[%c0_16, %c0_17] : memref<128x128xbf16, #tpu.memory_space<vmem>>, vector<128x128xbf16>
    %cst_18 = arith.constant dense<0.000000e+00> : vector<8x128xf32>
    %23 = tpu.matmul %21, %22, %cst_18 {dimension_numbers = #tpu.dot_dimension_numbers<[1], [0], [0], [1], [0, 0, 1, 1], [], []>} : vector<8x128xbf16>, vector<128x128xbf16>, vector<8x128xf32> -> vector<8x128xf32>
    %24 = arith.addf %20, %23 : vector<8x128xf32>
    %25 = math.tanh %24 : vector<8x128xf32>
    %c0_19 = arith.constant 0 : index
    %c0_20 = arith.constant 0 : index
    %26 = vector.load %arg4[%c0_19, %c0_20] : memref<8x128xf32, #tpu.memory_space<vmem>>, vector<8x128xf32>
    tpu.vector_store %arg4[%c0_19, %c0_20], %25 {strides = array<i32>} : memref<8x128xf32, #tpu.memory_space<vmem>>, vector<8x128xf32>,
    %27 = arith.truncf %25 : vector<8x128xf32> to vector<8x128xbf16>
    %28 = arith.index_cast %c1_i32 : i32 to index
    %c0_21 = arith.constant 0 : index
    %c0_22 = arith.constant 0 : index
    %29 = vector.load %arg3[%28, %c0_21, %c0_22] : memref<8x8x128xbf16, #tpu.memory_space<vmem>>, vector<1x8x128xbf16>
    %30 = vector.shape_cast %29 : vector<1x8x128xbf16> to vector<8x128xbf16>
    %31 = vector.shape_cast %27 : vector<8x128xbf16> to vector<1x8x128xbf16>
    tpu.vector_store %arg3[%28, %c0_21, %c0_22], %31 {strides = array<i32>} : memref<8x8x128xbf16, #tpu.memory_space<vmem>>, vector<1x8x128xbf16>,
    %c2_i32 = arith.constant 2 : i32
    %c0_23 = arith.constant 0 : index
    %c0_24 = arith.constant 0 : index
    %32 = vector.load %arg4[%c0_23, %c0_24] : memref<8x128xf32, #tpu.memory_space<vmem>>, vector<8x128xf32>
    %33 = arith.index_cast %c2_i32 : i32 to index
    %c0_25 = arith.constant 0 : index
    %c0_26 = arith.constant 0 : index
    %34 = vector.load %arg1[%33, %c0_25, %c0_26] : memref<8x8x128xf32, #tpu.memory_space<vmem>>, vector<1x8x128xf32>
    %35 = vector.shape_cast %34 : vector<1x8x128xf32> to vector<8x128xf32>
    %36 = arith.truncf %32 : vector<8x128xf32> to vector<8x128xbf16>
    %c0_27 = arith.constant 0 : index
    %c0_28 = arith.constant 0 : index
    %37 = vector.load %arg2[%c0_27, %c0_28] : memref<128x128xbf16, #tpu.memory_space<vmem>>, vector<128x128xbf16>
    %cst_29 = arith.constant dense<0.000000e+00> : vector<8x128xf32>
    %38 = tpu.matmul %36, %37, %cst_29 {dimension_numbers = #tpu.dot_dimension_numbers<[1], [0], [0], [1], [0, 0, 1, 1], [], []>} : vector<8x128xbf16>, vector<128x128xbf16>, vector<8x128xf32> -> vector<8x128xf32>
    %39 = arith.addf %35, %38 : vector<8x128xf32>
    %40 = math.tanh %39 : vector<8x128xf32>
    %c0_30 = arith.constant 0 : index
    %c0_31 = arith.constant 0 : index
    %41 = vector.load %arg4[%c0_30, %c0_31] : memref<8x128xf32, #tpu.memory_space<vmem>>, vector<8x128xf32>
    tpu.vector_store %arg4[%c0_30, %c0_31], %40 {strides = array<i32>} : memref<8x128xf32, #tpu.memory_space<vmem>>, vector<8x128xf32>,
    %42 = arith.truncf %40 : vector<8x128xf32> to vector<8x128xbf16>
    %43 = arith.index_cast %c2_i32 : i32 to index
    %c0_32 = arith.constant 0 : index
    %c0_33 = arith.constant 0 : index
    %44 = vector.load %arg3[%43, %c0_32, %c0_33] : memref<8x8x128xbf16, #tpu.memory_space<vmem>>, vector<1x8x128xbf16>
    %45 = vector.shape_cast %44 : vector<1x8x128xbf16> to vector<8x128xbf16>
    %46 = vector.shape_cast %42 : vector<8x128xbf16> to vector<1x8x128xbf16>
    tpu.vector_store %arg3[%43, %c0_32, %c0_33], %46 {strides = array<i32>} : memref<8x8x128xbf16, #tpu.memory_space<vmem>>, vector<1x8x128xbf16>,
    %c3_i32 = arith.constant 3 : i32
    %c0_34 = arith.constant 0 : index
    %c0_35 = arith.constant 0 : index
    %47 = vector.load %arg4[%c0_34, %c0_35] : memref<8x128xf32, #tpu.memory_space<vmem>>, vector<8x128xf32>
    %48 = arith.index_cast %c3_i32 : i32 to index
    %c0_36 = arith.constant 0 : index
    %c0_37 = arith.constant 0 : index
    %49 = vector.load %arg1[%48, %c0_36, %c0_37] : memref<8x8x128xf32, #tpu.memory_space<vmem>>, vector<1x8x128xf32>
    %50 = vector.shape_cast %49 : vector<1x8x128xf32> to vector<8x128xf32>
    %51 = arith.truncf %47 : vector<8x128xf32> to vector<8x128xbf16>
    %c0_38 = arith.constant 0 : index
    %c0_39 = arith.constant 0 : index
    %52 = vector.load %arg2[%c0_38, %c0_39] : memref<128x128xbf16, #tpu.memory_space<vmem>>, vector<128x128xbf16>
    %cst_40 = arith.constant dense<0.000000e+00> : vector<8x128xf32>
    %53 = tpu.matmul %51, %52, %cst_40 {dimension_numbers = #tpu.dot_dimension_numbers<[1], [0], [0], [1], [0, 0, 1, 1], [], []>} : vector<8x128xbf16>, vector<128x128xbf16>, vector<8x128xf32> -> vector<8x128xf32>
    %54 = arith.addf %50, %53 : vector<8x128xf32>
    %55 = math.tanh %54 : vector<8x128xf32>
    %c0_41 = arith.constant 0 : index
    %c0_42 = arith.constant 0 : index
    %56 = vector.load %arg4[%c0_41, %c0_42] : memref<8x128xf32, #tpu.memory_space<vmem>>, vector<8x128xf32>
    tpu.vector_store %arg4[%c0_41, %c0_42], %55 {strides = array<i32>} : memref<8x128xf32, #tpu.memory_space<vmem>>, vector<8x128xf32>,
    %57 = arith.truncf %55 : vector<8x128xf32> to vector<8x128xbf16>
    %58 = arith.index_cast %c3_i32 : i32 to index
    %c0_43 = arith.constant 0 : index
    %c0_44 = arith.constant 0 : index
    %59 = vector.load %arg3[%58, %c0_43, %c0_44] : memref<8x8x128xbf16, #tpu.memory_space<vmem>>, vector<1x8x128xbf16>
    %60 = vector.shape_cast %59 : vector<1x8x128xbf16> to vector<8x128xbf16>
    %61 = vector.shape_cast %57 : vector<8x128xbf16> to vector<1x8x128xbf16>
    tpu.vector_store %arg3[%58, %c0_43, %c0_44], %61 {strides = array<i32>} : memref<8x8x128xbf16, #tpu.memory_space<vmem>>, vector<1x8x128xbf16>,
    %c4_i32 = arith.constant 4 : i32
    %c0_45 = arith.constant 0 : index
    %c0_46 = arith.constant 0 : index
    %62 = vector.load %arg4[%c0_45, %c0_46] : memref<8x128xf32, #tpu.memory_space<vmem>>, vector<8x128xf32>
    %63 = arith.index_cast %c4_i32 : i32 to index
    %c0_47 = arith.constant 0 : index
    %c0_48 = arith.constant 0 : index
    %64 = vector.load %arg1[%63, %c0_47, %c0_48] : memref<8x8x128xf32, #tpu.memory_space<vmem>>, vector<1x8x128xf32>
    %65 = vector.shape_cast %64 : vector<1x8x128xf32> to vector<8x128xf32>
    %66 = arith.truncf %62 : vector<8x128xf32> to vector<8x128xbf16>
    %c0_49 = arith.constant 0 : index
    %c0_50 = arith.constant 0 : index
    %67 = vector.load %arg2[%c0_49, %c0_50] : memref<128x128xbf16, #tpu.memory_space<vmem>>, vector<128x128xbf16>
    %cst_51 = arith.constant dense<0.000000e+00> : vector<8x128xf32>
    %68 = tpu.matmul %66, %67, %cst_51 {dimension_numbers = #tpu.dot_dimension_numbers<[1], [0], [0], [1], [0, 0, 1, 1], [], []>} : vector<8x128xbf16>, vector<128x128xbf16>, vector<8x128xf32> -> vector<8x128xf32>
    %69 = arith.addf %65, %68 : vector<8x128xf32>
    %70 = math.tanh %69 : vector<8x128xf32>
    %c0_52 = arith.constant 0 : index
    %c0_53 = arith.constant 0 : index
    %71 = vector.load %arg4[%c0_52, %c0_53] : memref<8x128xf32, #tpu.memory_space<vmem>>, vector<8x128xf32>
    tpu.vector_store %arg4[%c0_52, %c0_53], %70 {strides = array<i32>} : memref<8x128xf32, #tpu.memory_space<vmem>>, vector<8x128xf32>,
    %72 = arith.truncf %70 : vector<8x128xf32> to vector<8x128xbf16>
    %73 = arith.index_cast %c4_i32 : i32 to index
    %c0_54 = arith.constant 0 : index
    %c0_55 = arith.constant 0 : index
    %74 = vector.load %arg3[%73, %c0_54, %c0_55] : memref<8x8x128xbf16, #tpu.memory_space<vmem>>, vector<1x8x128xbf16>
    %75 = vector.shape_cast %74 : vector<1x8x128xbf16> to vector<8x128xbf16>
    %76 = vector.shape_cast %72 : vector<8x128xbf16> to vector<1x8x128xbf16>
    tpu.vector_store %arg3[%73, %c0_54, %c0_55], %76 {strides = array<i32>} : memref<8x8x128xbf16, #tpu.memory_space<vmem>>, vector<1x8x128xbf16>,
    %c5_i32 = arith.constant 5 : i32
    %c0_56 = arith.constant 0 : index
    %c0_57 = arith.constant 0 : index
    %77 = vector.load %arg4[%c0_56, %c0_57] : memref<8x128xf32, #tpu.memory_space<vmem>>, vector<8x128xf32>
    %78 = arith.index_cast %c5_i32 : i32 to index
    %c0_58 = arith.constant 0 : index
    %c0_59 = arith.constant 0 : index
    %79 = vector.load %arg1[%78, %c0_58, %c0_59] : memref<8x8x128xf32, #tpu.memory_space<vmem>>, vector<1x8x128xf32>
    %80 = vector.shape_cast %79 : vector<1x8x128xf32> to vector<8x128xf32>
    %81 = arith.truncf %77 : vector<8x128xf32> to vector<8x128xbf16>
    %c0_60 = arith.constant 0 : index
    %c0_61 = arith.constant 0 : index
    %82 = vector.load %arg2[%c0_60, %c0_61] : memref<128x128xbf16, #tpu.memory_space<vmem>>, vector<128x128xbf16>
    %cst_62 = arith.constant dense<0.000000e+00> : vector<8x128xf32>
    %83 = tpu.matmul %81, %82, %cst_62 {dimension_numbers = #tpu.dot_dimension_numbers<[1], [0], [0], [1], [0, 0, 1, 1], [], []>} : vector<8x128xbf16>, vector<128x128xbf16>, vector<8x128xf32> -> vector<8x128xf32>
    %84 = arith.addf %80, %83 : vector<8x128xf32>
    %85 = math.tanh %84 : vector<8x128xf32>
    %c0_63 = arith.constant 0 : index
    %c0_64 = arith.constant 0 : index
    %86 = vector.load %arg4[%c0_63, %c0_64] : memref<8x128xf32, #tpu.memory_space<vmem>>, vector<8x128xf32>
    tpu.vector_store %arg4[%c0_63, %c0_64], %85 {strides = array<i32>} : memref<8x128xf32, #tpu.memory_space<vmem>>, vector<8x128xf32>,
    %87 = arith.truncf %85 : vector<8x128xf32> to vector<8x128xbf16>
    %88 = arith.index_cast %c5_i32 : i32 to index
    %c0_65 = arith.constant 0 : index
    %c0_66 = arith.constant 0 : index
    %89 = vector.load %arg3[%88, %c0_65, %c0_66] : memref<8x8x128xbf16, #tpu.memory_space<vmem>>, vector<1x8x128xbf16>
    %90 = vector.shape_cast %89 : vector<1x8x128xbf16> to vector<8x128xbf16>
    %91 = vector.shape_cast %87 : vector<8x128xbf16> to vector<1x8x128xbf16>
    tpu.vector_store %arg3[%88, %c0_65, %c0_66], %91 {strides = array<i32>} : memref<8x8x128xbf16, #tpu.memory_space<vmem>>, vector<1x8x128xbf16>,
    %c6_i32 = arith.constant 6 : i32
    %c0_67 = arith.constant 0 : index
    %c0_68 = arith.constant 0 : index
    %92 = vector.load %arg4[%c0_67, %c0_68] : memref<8x128xf32, #tpu.memory_space<vmem>>, vector<8x128xf32>
    %93 = arith.index_cast %c6_i32 : i32 to index
    %c0_69 = arith.constant 0 : index
    %c0_70 = arith.constant 0 : index
    %94 = vector.load %arg1[%93, %c0_69, %c0_70] : memref<8x8x128xf32, #tpu.memory_space<vmem>>, vector<1x8x128xf32>
    %95 = vector.shape_cast %94 : vector<1x8x128xf32> to vector<8x128xf32>
    %96 = arith.truncf %92 : vector<8x128xf32> to vector<8x128xbf16>
    %c0_71 = arith.constant 0 : index
    %c0_72 = arith.constant 0 : index
    %97 = vector.load %arg2[%c0_71, %c0_72] : memref<128x128xbf16, #tpu.memory_space<vmem>>, vector<128x128xbf16>
    %cst_73 = arith.constant dense<0.000000e+00> : vector<8x128xf32>
    %98 = tpu.matmul %96, %97, %cst_73 {dimension_numbers = #tpu.dot_dimension_numbers<[1], [0], [0], [1], [0, 0, 1, 1], [], []>} : vector<8x128xbf16>, vector<128x128xbf16>, vector<8x128xf32> -> vector<8x128xf32>
    %99 = arith.addf %95, %98 : vector<8x128xf32>
    %100 = math.tanh %99 : vector<8x128xf32>
    %c0_74 = arith.constant 0 : index
    %c0_75 = arith.constant 0 : index
    %101 = vector.load %arg4[%c0_74, %c0_75] : memref<8x128xf32, #tpu.memory_space<vmem>>, vector<8x128xf32>
    tpu.vector_store %arg4[%c0_74, %c0_75], %100 {strides = array<i32>} : memref<8x128xf32, #tpu.memory_space<vmem>>, vector<8x128xf32>,
    %102 = arith.truncf %100 : vector<8x128xf32> to vector<8x128xbf16>
    %103 = arith.index_cast %c6_i32 : i32 to index
    %c0_76 = arith.constant 0 : index
    %c0_77 = arith.constant 0 : index
    %104 = vector.load %arg3[%103, %c0_76, %c0_77] : memref<8x8x128xbf16, #tpu.memory_space<vmem>>, vector<1x8x128xbf16>
    %105 = vector.shape_cast %104 : vector<1x8x128xbf16> to vector<8x128xbf16>
    %106 = vector.shape_cast %102 : vector<8x128xbf16> to vector<1x8x128xbf16>
    tpu.vector_store %arg3[%103, %c0_76, %c0_77], %106 {strides = array<i32>} : memref<8x8x128xbf16, #tpu.memory_space<vmem>>, vector<1x8x128xbf16>,
    %c7_i32 = arith.constant 7 : i32
    %c0_78 = arith.constant 0 : index
    %c0_79 = arith.constant 0 : index
    %107 = vector.load %arg4[%c0_78, %c0_79] : memref<8x128xf32, #tpu.memory_space<vmem>>, vector<8x128xf32>
    %108 = arith.index_cast %c7_i32 : i32 to index
    %c0_80 = arith.constant 0 : index
    %c0_81 = arith.constant 0 : index
    %109 = vector.load %arg1[%108, %c0_80, %c0_81] : memref<8x8x128xf32, #tpu.memory_space<vmem>>, vector<1x8x128xf32>
    %110 = vector.shape_cast %109 : vector<1x8x128xf32> to vector<8x128xf32>
    %111 = arith.truncf %107 : vector<8x128xf32> to vector<8x128xbf16>
    %c0_82 = arith.constant 0 : index
    %c0_83 = arith.constant 0 : index
    %112 = vector.load %arg2[%c0_82, %c0_83] : memref<128x128xbf16, #tpu.memory_space<vmem>>, vector<128x128xbf16>
    %cst_84 = arith.constant dense<0.000000e+00> : vector<8x128xf32>
    %113 = tpu.matmul %111, %112, %cst_84 {dimension_numbers = #tpu.dot_dimension_numbers<[1], [0], [0], [1], [0, 0, 1, 1], [], []>} : vector<8x128xbf16>, vector<128x128xbf16>, vector<8x128xf32> -> vector<8x128xf32>
    %114 = arith.addf %110, %113 : vector<8x128xf32>
    %115 = math.tanh %114 : vector<8x128xf32>
    %c0_85 = arith.constant 0 : index
    %c0_86 = arith.constant 0 : index
    %116 = vector.load %arg4[%c0_85, %c0_86] : memref<8x128xf32, #tpu.memory_space<vmem>>, vector<8x128xf32>
    tpu.vector_store %arg4[%c0_85, %c0_86], %115 {strides = array<i32>} : memref<8x128xf32, #tpu.memory_space<vmem>>, vector<8x128xf32>,
    %117 = arith.truncf %115 : vector<8x128xf32> to vector<8x128xbf16>
    %118 = arith.index_cast %c7_i32 : i32 to index
    %c0_87 = arith.constant 0 : index
    %c0_88 = arith.constant 0 : index
    %119 = vector.load %arg3[%118, %c0_87, %c0_88] : memref<8x8x128xbf16, #tpu.memory_space<vmem>>, vector<1x8x128xbf16>
    %120 = vector.shape_cast %119 : vector<1x8x128xbf16> to vector<8x128xbf16>
    %121 = vector.shape_cast %117 : vector<8x128xbf16> to vector<1x8x128xbf16>
    tpu.vector_store %arg3[%118, %c0_87, %c0_88], %121 {strides = array<i32>} : memref<8x8x128xbf16, #tpu.memory_space<vmem>>, vector<1x8x128xbf16>,
    %c8_i32 = arith.constant 8 : i32
    return
  }
  func.func @transform_0(%arg0: i32) -> (i32, i32, i32) {
    %c0_i32 = arith.constant 0 : i32
    %c0_i32_0 = arith.constant 0 : i32
    %c0_i32_1 = arith.constant 0 : i32
    return %c0_i32, %arg0, %c0_i32_0 : i32, i32, i32
  }
  func.func @transform_1(%arg0: i32) -> (i32, i32) {
    %c0_i32 = arith.constant 0 : i32
    %c0_i32_0 = arith.constant 0 : i32
    %c0_i32_1 = arith.constant 0 : i32
    return %c0_i32, %c0_i32_0 : i32, i32
  }
  func.func @transform_2(%arg0: i32) -> (i32, i32, i32) {
    %c0_i32 = arith.constant 0 : i32
    %c0_i32_0 = arith.constant 0 : i32
    %c0_i32_1 = arith.constant 0 : i32
    return %c0_i32, %arg0, %c0_i32_0 : i32, i32, i32
  }
}

</mosaic_0001>

<llo_original>
// kernel: rnn_model_forward.3
$region0: #{rnn_model_forward.3}
  #allocation0 [shape = 'u32[]', space=smem, size = 0x4, offset = 0x4, fixed_abs, tag = 'smem constant byte address 0x4 - core index']
  #allocation1 [shape = 'u32[144,128]{1,0:T(1,128)}', space=vmem, size = 0x12000, scoped, tag = 'internal scratch']
  %s0 = inlined_call_operand.hbm [shape: bf16[64,128], index: 0, kind: input, shape index: {}]
  %s1 = inlined_call_operand.hbm [shape: bf16[128,128], index: 1, kind: input, shape index: {}]
  %s2 = inlined_call_operand.hbm [shape: f32[1,128], index: 2, kind: input, shape index: {}]
  %s3 = inlined_call_operand.hbm [shape: f32[64,128], index: 3, kind: output, shape index: {}]
  %s4 = sld [smem:[#allocation0]]
  $region34: #{rnn_model_forward.3} parent=0
    _
  %s6 = ssub.s32 1, %s4
  %s7 = scalar_select 0, %s6, %s4
  $region1: #{rnn_model_forward.3} parent=0
    #allocation2 [shape = 'u8[16384]{0}', space=vmem, size = 0x4000, scoped, tag = 'input window, operand 0, single buffered']
    #allocation3 [shape = 's32[1]{0}', space=sflag, size = 0x4, scoped, tag = 'scoped memory for rnn_model_forward.3']
    #allocation4 [shape = 's32[1]{0}', space=sflag, size = 0x4, scoped, tag = 'scoped memory for rnn_model_forward.3']
    #allocation5 [shape = 'u8[32768]{0}', space=vmem, size = 0x8000, scoped, tag = 'input window, operand 1, single buffered']
    #allocation6 [shape = 's32[1]{0}', space=sflag, size = 0x4, scoped, tag = 'scoped memory for rnn_model_forward.3']
    #allocation7 [shape = 'u8[512]{0}', space=vmem, size = 0x400, scoped, tag = 'input window, operand 2, single buffered']
    #allocation8 [shape = 'u8[32768]{0}', space=vmem, size = 0x8000, scoped, tag = 'output window, operand 0, single buffered']
    %8 = vsyncpa [#allocation3], 0
    %9 = vsyncpa [#allocation6], 0
    %10 = vsyncpa [#allocation4], 0
    // Predicated region
    $region2: #{rnn_model_forward.3} parent=1 // pred_check
      _
    $region3: #{rnn_model_forward.3} parent=1 // pred_check_branch
      %12 = sbr.rel (0) target = $region5
    $region4: #{rnn_model_forward.3} parent=1 // pred_region
      %s14 = ssub.s32 512, 512
      %15 = vsyncadd [#allocation3], %s14
      %s16 = sshll.u32 [#allocation2], 4
      %s17 = int_to_ptr.vmem [resolvable:$true] %s16
      %22 = dma.hbm_to_vmem [thread:$0]  %s0, 512, %s17, [#allocation3], 64, 64, 4
    $region5: #{rnn_model_forward.3} parent=1 // pred_fallthru
      _
    // Predicated region
    $region6: #{rnn_model_forward.3} parent=1 // pred_check
      _
    $region7: #{rnn_model_forward.3} parent=1 // pred_check_branch
      %24 = sbr.rel (0) target = $region9
    $region8: #{rnn_model_forward.3} parent=1 // pred_region
      %s26 = ssub.s32 1024, 1024
      %27 = vsyncadd [#allocation6], %s26
      %s28 = sshll.u32 [#allocation5], 4
      %s29 = int_to_ptr.vmem [resolvable:$true] %s28
      %34 = dma.hbm_to_vmem [thread:$0]  %s1, 1024, %s29, [#allocation6], 64, 64, 4
    $region9: #{rnn_model_forward.3} parent=1 // pred_fallthru
      _
    // Predicated region
    $region10: #{rnn_model_forward.3} parent=1 // pred_check
      _
    $region11: #{rnn_model_forward.3} parent=1 // pred_check_branch
      %36 = sbr.rel (0) target = $region13
    $region12: #{rnn_model_forward.3} parent=1 // pred_region
      %s38 = ssub.s32 16, 16
      %39 = vsyncadd [#allocation6], %s38
      %s41 = sshll.u32 [#allocation7], 4
      %s42 = int_to_ptr.vmem [resolvable:$true] %s41
      %44 = dma.hbm_to_vmem [thread:$0]  %s2, 16, %s42, [#allocation6]
    $region13: #{rnn_model_forward.3} parent=1 // pred_fallthru
      _
    // Predicated region
    $region14: #{rnn_model_forward.3} parent=1 // pred_check
      _
    $region15: #{rnn_model_forward.3} parent=1 // pred_check_branch
      %46 = sbr.rel (0) target = $region17
    $region16: #{rnn_model_forward.3} parent=1 // pred_region
      %47 = dma.done [#allocation3], 512
    $region17: #{rnn_model_forward.3} parent=1 // pred_fallthru
      _
    // Predicated region
    $region18: #{rnn_model_forward.3} parent=1 // pred_check
      _
    $region19: #{rnn_model_forward.3} parent=1 // pred_check_branch
      %49 = sbr.rel (0) target = $region21
    $region20: #{rnn_model_forward.3} parent=1 // pred_region
      %50 = dma.done [#allocation6], 1024
    $region21: #{rnn_model_forward.3} parent=1 // pred_fallthru
      _
    // Predicated region
    $region22: #{rnn_model_forward.3} parent=1 // pred_check
      _
    $region23: #{rnn_model_forward.3} parent=1 // pred_check_branch
      %52 = sbr.rel (0) target = $region25
    $region24: #{rnn_model_forward.3} parent=1 // pred_region
      %53 = dma.done [#allocation6], 16
    $region25: #{rnn_model_forward.3} parent=1 // pred_fallthru
      _
    %v55 = vld [vmem:[#allocation2] sm:$0xf]
    %v56 = vld [vmem:[#allocation2 + $0x4] sm:$0xf]
    %v57 = vld [vmem:[#allocation2 + $0x8] sm:$0xf]
    %v58 = vld [vmem:[#allocation2 + $0xc] sm:$0xf]
    %v59 = vld [vmem:[#allocation2 + $0x10] sm:$0xf]
    %v60 = vld [vmem:[#allocation2 + $0x14] sm:$0xf]
    %v61 = vld [vmem:[#allocation2 + $0x18] sm:$0xf]
    %v62 = vld [vmem:[#allocation2 + $0x1c] sm:$0xf]
    %v63 = vld [vmem:[#allocation5] sm:$0xf]
    %v64 = vld [vmem:[#allocation5 + $0x4] sm:$0xf]
    %v65 = vld [vmem:[#allocation5 + $0x8] sm:$0xf]
    %v66 = vld [vmem:[#allocation5 + $0xc] sm:$0xf]
    %v67 = vld [vmem:[#allocation5 + $0x10] sm:$0xf]
    %v68 = vld [vmem:[#allocation5 + $0x14] sm:$0xf]
    %v69 = vld [vmem:[#allocation5 + $0x18] sm:$0xf]
    %v70 = vld [vmem:[#allocation5 + $0x1c] sm:$0xf]
    %v71 = vld [vmem:[#allocation5 + $0x20] sm:$0xf]
    %v72 = vld [vmem:[#allocation5 + $0x24] sm:$0xf]
    %v73 = vld [vmem:[#allocation5 + $0x28] sm:$0xf]
    %v74 = vld [vmem:[#allocation5 + $0x2c] sm:$0xf]
    %v75 = vld [vmem:[#allocation5 + $0x30] sm:$0xf]
    %v76 = vld [vmem:[#allocation5 + $0x34] sm:$0xf]
    %v77 = vld [vmem:[#allocation5 + $0x38] sm:$0xf]
    %v78 = vld [vmem:[#allocation5 + $0x3c] sm:$0xf]
    %v79 = vld [vmem:[#allocation7] sm:$0x1]
    %v81 = vlaneseq
    %v82 = vshrl.u32 %v81, 7
    %v83 = vsub.s32 0, %v82
    %v84 = vrot.slane %v79, %v83
    %v94 = vunpack.c.l.b16 %v55
    %v95 = vunpack.c.l.b16 %v56
    %v96 = vunpack.c.l.b16 %v57
    %v97 = vunpack.c.l.b16 %v58
    %v98 = vunpack.c.l.b16 %v59
    %v99 = vunpack.c.l.b16 %v60
    %v100 = vunpack.c.l.b16 %v61
    %v101 = vunpack.c.l.b16 %v62
    %v102 = vpack.c.b16 %v95, %v94
    %v103 = vpack.c.b16 %v97, %v96
    %v104 = vpack.c.b16 %v99, %v98
    %v105 = vpack.c.b16 %v101, %v100
    %v126 = vunpack.c.l.b16 %v63
    %v127 = vunpack.c.l.b16 %v64
    %v128 = vunpack.c.l.b16 %v65
    %v129 = vunpack.c.l.b16 %v66
    %v130 = vunpack.c.l.b16 %v67
    %v131 = vunpack.c.l.b16 %v68
    %v132 = vunpack.c.l.b16 %v69
    %v133 = vunpack.c.l.b16 %v70
    %v134 = vunpack.c.l.b16 %v71
    %v135 = vunpack.c.l.b16 %v72
    %v136 = vunpack.c.l.b16 %v73
    %v137 = vunpack.c.l.b16 %v74
    %v138 = vunpack.c.l.b16 %v75
    %v139 = vunpack.c.l.b16 %v76
    %v140 = vunpack.c.l.b16 %v77
    %v141 = vunpack.c.l.b16 %v78
    %v142 = vpack.c.b16 %v127, %v126
    %v143 = vpack.c.b16 %v129, %v128
    %v144 = vpack.c.b16 %v131, %v130
    %v145 = vpack.c.b16 %v133, %v132
    %v146 = vpack.c.b16 %v135, %v134
    %v147 = vpack.c.b16 %v137, %v136
    %v148 = vpack.c.b16 %v139, %v138
    %v149 = vpack.c.b16 %v141, %v140
    %158 = vmatprep.subr.bf16.mxu0 0
    %159 = vmatpush1.bf16.msra.mxu0 %v142
    %160 = vmatprep.subr.bf16.mxu0 0
    %161 = vmatpush1.bf16.msra.mxu0 %v143
    %162 = vmatprep.subr.bf16.mxu0 0
    %163 = vmatpush1.bf16.msra.mxu0 %v144
    %164 = vmatprep.subr.bf16.mxu0 0
    %165 = vmatpush1.bf16.msra.mxu0 %v145
    %166 = vmatprep.subr.bf16.mxu0 0
    %167 = vmatpush1.bf16.msra.mxu0 %v146
    %168 = vmatprep.subr.bf16.mxu0 0
    %169 = vmatpush1.bf16.msra.mxu0 %v147
    %170 = vmatprep.subr.bf16.mxu0 0
    %171 = vmatpush1.bf16.msra.mxu0 %v148
    %172 = vmatprep.subr.bf16.mxu0 0
    %173 = vmatpush1.bf16.msra.mxu0 %v149
    %174 = vmatprep.subr.bf16.mxu0 0
    %175 = vmatpush1.bf16.msra.mxu0 0
    %176 = vmatprep.subr.bf16.mxu0 0
    %177 = vmatpush1.bf16.msra.mxu0 0
    %178 = vmatprep.subr.bf16.mxu0 0
    %179 = vmatpush1.bf16.msra.mxu0 0
    %180 = vmatprep.subr.bf16.mxu0 0
    %181 = vmatpush1.bf16.msra.mxu0 0
    %182 = vmatprep.subr.bf16.mxu0 0
    %183 = vmatpush1.bf16.msra.mxu0 0
    %184 = vmatprep.subr.bf16.mxu0 0
    %185 = vmatpush1.bf16.msra.mxu0 0
    %186 = vmatprep.subr.bf16.mxu0 0
    %187 = vmatpush1.bf16.msra.mxu0 0
    %188 = vmatprep.subr.bf16.mxu0 0
    %189 = vmatpush1.bf16.msra.mxu0 0
    %190 = vmatprep.mubr.bf16.mxu0 0
    %191 = vmatmul.mubr.bf16.gmra.mrb[0].mxu0 %v102
    %v192 = vpop.f32.mrb[0].mxu0
    %v193 = vadd.f32 %v84, %v192
    %v194 = vpop.f32.mrb[0].mxu0
    %v195 = vpop.f32.mrb[0].mxu0
    %v196 = vadd.f32 %v84, %v195
    %v197 = vpop.f32.mrb[0].mxu0
    %198 = vmatprep.mubr.bf16.mxu0 0
    %199 = vmatmul.mubr.bf16.gmra.mrb[0].mxu0 %v103
    %v200 = vpop.f32.mrb[0].mxu0
    %v201 = vadd.f32 %v84, %v200
    %v202 = vpop.f32.mrb[0].mxu0
    %v203 = vpop.f32.mrb[0].mxu0
    %v204 = vadd.f32 %v84, %v203
    %v205 = vpop.f32.mrb[0].mxu0
    %206 = vmatprep.mubr.bf16.mxu0 0
    %207 = vmatmul.mubr.bf16.gmra.mrb[0].mxu0 %v104
    %v208 = vpop.f32.mrb[0].mxu0
    %v209 = vadd.f32 %v84, %v208
    %v210 = vpop.f32.mrb[0].mxu0
    %v211 = vpop.f32.mrb[0].mxu0
    %v212 = vadd.f32 %v84, %v211
    %v213 = vpop.f32.mrb[0].mxu0
    %214 = vmatprep.mubr.bf16.mxu0 0
    %215 = vmatmul.mubr.bf16.gmra.mrb[0].mxu0 %v105
    %v216 = vpop.f32.mrb[0].mxu0
    %v217 = vadd.f32 %v84, %v216
    %v218 = vpop.f32.mrb[0].mxu0
    %v219 = vpop.f32.mrb[0].mxu0
    %v220 = vadd.f32 %v84, %v219
    %v221 = vpop.f32.mrb[0].mxu0
    %222 = vdwg.mxu0
    %223 = vst [vmem:[#allocation8] sm:$0xff] %v193
    %224 = vst [vmem:[#allocation8 + $0x8] sm:$0xff] %v196
    %225 = vst [vmem:[#allocation8 + $0x10] sm:$0xff] %v201
    %226 = vst [vmem:[#allocation8 + $0x18] sm:$0xff] %v204
    %227 = vst [vmem:[#allocation8 + $0x20] sm:$0xff] %v209
    %228 = vst [vmem:[#allocation8 + $0x28] sm:$0xff] %v212
    %229 = vst [vmem:[#allocation8 + $0x30] sm:$0xff] %v217
    %230 = vst [vmem:[#allocation8 + $0x38] sm:$0xff] %v220
    // Predicated region
    $region26: #{rnn_model_forward.3} parent=1 // pred_check
      _
    $region27: #{rnn_model_forward.3} parent=1 // pred_check_branch
      %232 = sbr.rel (0) target = $region29
    $region28: #{rnn_model_forward.3} parent=1 // pred_region
      %s234 = ssub.s32 1024, 1024
      %235 = vsyncadd [#allocation4], %s234
      %s236 = sshll.u32 [#allocation8], 4
      %s237 = int_to_ptr.vmem [resolvable:$true] %s236
      %242 = dma.vmem_to_hbm [thread:$0]  %s237, 1024, %s3, [#allocation4], 128, 128, 8
    $region29: #{rnn_model_forward.3} parent=1 // pred_fallthru
      _
    // Predicated region
    $region30: #{rnn_model_forward.3} parent=1 // pred_check
      _
    $region31: #{rnn_model_forward.3} parent=1 // pred_check_branch
      %244 = sbr.rel (0) target = $region33
    $region32: #{rnn_model_forward.3} parent=1 // pred_region
      %245 = dma.done [#allocation4], 1024
    $region33: #{rnn_model_forward.3} parent=1 // pred_fallthru
      _
    %246 = vsyncpa [#allocation3], 1
    %247 = vsyncpa [#allocation6], 1
    %248 = vsyncpa [#allocation4], 1

// kernel: rnn_model_forward.4
$region0: #{rnn_model_forward.4}
  #allocation0 [shape = 'u32[]', space=smem, size = 0x4, offset = 0x4, fixed_abs, tag = 'smem constant byte address 0x4 - core index']
  #allocation1 [shape = 'u32[144,128]{1,0:T(1,128)}', space=vmem, size = 0x12000, scoped, tag = 'internal scratch']
  #allocation2 [shape = 'f32[8,128]{1,0:T(8,128)}', space=vmem, size = 0x1000, scoped, tag = 'scratch operand']
  %s0 = inlined_call_operand.hbm [shape: f32[8,8,128], index: 0, kind: input, shape index: {}]
  %s1 = inlined_call_operand.hbm [shape: bf16[128,128], index: 1, kind: input, shape index: {}]
  %s2 = inlined_call_operand.hbm [shape: bf16[8,8,128], index: 2, kind: output, shape index: {}]
  %s3 = sld [smem:[#allocation0]]
  $region26: #{rnn_model_forward.4} parent=0
    _
  %s5 = ssub.s32 1, %s3
  %s6 = scalar_select 0, %s5, %s3
  $region1: #{rnn_model_forward.4} parent=0
    #allocation3 [shape = 'u8[32768]{0}', space=vmem, size = 0x8000, scoped, tag = 'input window, operand 0, single buffered']
    #allocation4 [shape = 's32[1]{0}', space=sflag, size = 0x4, scoped, tag = 'scoped memory for rnn_model_forward.4']
    #allocation5 [shape = 's32[1]{0}', space=sflag, size = 0x4, scoped, tag = 'scoped memory for rnn_model_forward.4']
    #allocation6 [shape = 'u8[32768]{0}', space=vmem, size = 0x8000, scoped, tag = 'input window, operand 1, single buffered']
    #allocation7 [shape = 's32[1]{0}', space=sflag, size = 0x4, scoped, tag = 'scoped memory for rnn_model_forward.4']
    #allocation8 [shape = 'u8[16384]{0}', space=vmem, size = 0x4000, scoped, tag = 'output window, operand 0, single buffered']
    %7 = vsyncpa [#allocation4], 0
    %8 = vsyncpa [#allocation7], 0
    %9 = vsyncpa [#allocation5], 0
    // Predicated region
    $region2: #{rnn_model_forward.4} parent=1 // pred_check
      _
    $region3: #{rnn_model_forward.4} parent=1 // pred_check_branch
      %11 = sbr.rel (0) target = $region5
    $region4: #{rnn_model_forward.4} parent=1 // pred_region
      %s13 = ssub.s32 1024, 1024
      %14 = vsyncadd [#allocation4], %s13
      %s15 = sshll.u32 [#allocation3], 4
      %s16 = int_to_ptr.vmem [resolvable:$true] %s15
      %21 = dma.hbm_to_vmem [thread:$0]  %s0, 1024, %s16, [#allocation4], 128, 128, 8
    $region5: #{rnn_model_forward.4} parent=1 // pred_fallthru
      _
    // Predicated region
    $region6: #{rnn_model_forward.4} parent=1 // pred_check
      _
    $region7: #{rnn_model_forward.4} parent=1 // pred_check_branch
      %23 = sbr.rel (0) target = $region9
    $region8: #{rnn_model_forward.4} parent=1 // pred_region
      %s25 = ssub.s32 1024, 1024
      %26 = vsyncadd [#allocation7], %s25
      %s27 = sshll.u32 [#allocation6], 4
      %s28 = int_to_ptr.vmem [resolvable:$true] %s27
      %33 = dma.hbm_to_vmem [thread:$0]  %s1, 1024, %s28, [#allocation7], 64, 64, 4
    $region9: #{rnn_model_forward.4} parent=1 // pred_fallthru
      _
    // Predicated region
    $region10: #{rnn_model_forward.4} parent=1 // pred_check
      _
    $region11: #{rnn_model_forward.4} parent=1 // pred_check_branch
      %35 = sbr.rel (0) target = $region13
    $region12: #{rnn_model_forward.4} parent=1 // pred_region
      %36 = dma.done [#allocation4], 1024
    $region13: #{rnn_model_forward.4} parent=1 // pred_fallthru
      _
    // Predicated region
    $region14: #{rnn_model_forward.4} parent=1 // pred_check
      _
    $region15: #{rnn_model_forward.4} parent=1 // pred_check_branch
      %38 = sbr.rel (0) target = $region17
    $region16: #{rnn_model_forward.4} parent=1 // pred_region
      %39 = dma.done [#allocation7], 1024
    $region17: #{rnn_model_forward.4} parent=1 // pred_fallthru
      _
    %41 = vst [vmem:[#allocation2] sm:$0xff] 0.0
    %v42 = vld [vmem:[#allocation2] sm:$0xff]
    %v43 = vld [vmem:[#allocation3] sm:$0xff]
    %v44 = vpack.c.bf16 %v42, %v42
    %v45 = vld [vmem:[#allocation6] sm:$0xf]
    %v46 = vld [vmem:[#allocation6 + $0x4] sm:$0xf]
    %v47 = vld [vmem:[#allocation6 + $0x8] sm:$0xf]
    %v48 = vld [vmem:[#allocation6 + $0xc] sm:$0xf]
    %v49 = vld [vmem:[#allocation6 + $0x10] sm:$0xf]
    %v50 = vld [vmem:[#allocation6 + $0x14] sm:$0xf]
    %v51 = vld [vmem:[#allocation6 + $0x18] sm:$0xf]
    %v52 = vld [vmem:[#allocation6 + $0x1c] sm:$0xf]
    %v53 = vld [vmem:[#allocation6 + $0x20] sm:$0xf]
    %v54 = vld [vmem:[#allocation6 + $0x24] sm:$0xf]
    %v55 = vld [vmem:[#allocation6 + $0x28] sm:$0xf]
    %v56 = vld [vmem:[#allocation6 + $0x2c] sm:$0xf]
    %v57 = vld [vmem:[#allocation6 + $0x30] sm:$0xf]
    %v58 = vld [vmem:[#allocation6 + $0x34] sm:$0xf]
    %v59 = vld [vmem:[#allocation6 + $0x38] sm:$0xf]
    %v60 = vld [vmem:[#allocation6 + $0x3c] sm:$0xf]
    %v77 = vunpack.c.l.b16 %v45
    %v78 = vunpack.c.l.b16 %v46
    %v79 = vunpack.c.l.b16 %v47
    %v80 = vunpack.c.l.b16 %v48
    %v81 = vunpack.c.l.b16 %v49
    %v82 = vunpack.c.l.b16 %v50
    %v83 = vunpack.c.l.b16 %v51
    %v84 = vunpack.c.l.b16 %v52
    %v85 = vunpack.c.l.b16 %v53
    %v86 = vunpack.c.l.b16 %v54
    %v87 = vunpack.c.l.b16 %v55
    %v88 = vunpack.c.l.b16 %v56
    %v89 = vunpack.c.l.b16 %v57
    %v90 = vunpack.c.l.b16 %v58
    %v91 = vunpack.c.l.b16 %v59
    %v92 = vunpack.c.l.b16 %v60
    %v93 = vpack.c.b16 %v78, %v77
    %v94 = vpack.c.b16 %v80, %v79
    %v95 = vpack.c.b16 %v82, %v81
    %v96 = vpack.c.b16 %v84, %v83
    %v97 = vpack.c.b16 %v86, %v85
    %v98 = vpack.c.b16 %v88, %v87
    %v99 = vpack.c.b16 %v90, %v89
    %v100 = vpack.c.b16 %v92, %v91
    %109 = vmatprep.subr.bf16.mxu0 0
    %110 = vmatpush1.bf16.msra.mxu0 %v93
    %111 = vmatprep.subr.bf16.mxu0 0
    %112 = vmatpush1.bf16.msra.mxu0 %v94
    %113 = vmatprep.subr.bf16.mxu0 0
    %114 = vmatpush1.bf16.msra.mxu0 %v95
    %115 = vmatprep.subr.bf16.mxu0 0
    %116 = vmatpush1.bf16.msra.mxu0 %v96
    %117 = vmatprep.subr.bf16.mxu0 0
    %118 = vmatpush1.bf16.msra.mxu0 %v97
    %119 = vmatprep.subr.bf16.mxu0 0
    %120 = vmatpush1.bf16.msra.mxu0 %v98
    %121 = vmatprep.subr.bf16.mxu0 0
    %122 = vmatpush1.bf16.msra.mxu0 %v99
    %123 = vmatprep.subr.bf16.mxu0 0
    %124 = vmatpush1.bf16.msra.mxu0 %v100
    %125 = vmatprep.subr.bf16.mxu0 0
    %126 = vmatpush1.bf16.msra.mxu0 0
    %127 = vmatprep.subr.bf16.mxu0 0
    %128 = vmatpush1.bf16.msra.mxu0 0
    %129 = vmatprep.subr.bf16.mxu0 0
    %130 = vmatpush1.bf16.msra.mxu0 0
    %131 = vmatprep.subr.bf16.mxu0 0
    %132 = vmatpush1.bf16.msra.mxu0 0
    %133 = vmatprep.subr.bf16.mxu0 0
    %134 = vmatpush1.bf16.msra.mxu0 0
    %135 = vmatprep.subr.bf16.mxu0 0
    %136 = vmatpush1.bf16.msra.mxu0 0
    %137 = vmatprep.subr.bf16.mxu0 0
    %138 = vmatpush1.bf16.msra.mxu0 0
    %139 = vmatprep.subr.bf16.mxu0 0
    %140 = vmatpush1.bf16.msra.mxu0 0
    %141 = vmatprep.mubr.bf16.mxu0 0
    %142 = vmatmul.mubr.bf16.gmra.mrb[0].mxu0 %v44
    %v143 = vpop.f32.mrb[0].mxu0
    %v144 = vadd.f32 0.0, %v143
    %v145 = vpop.f32.mrb[0].mxu0
    %v146 = vpop.f32.mrb[0].mxu0
    %v147 = vpop.f32.mrb[0].mxu0
    %148 = vdwg.mxu0
    %v149 = vadd.f32 %v43, %v144
    %v150 = vtanh.pop %v149
    %151 = vst [vmem:[#allocation2] sm:$0xff] %v150
    %v152 = vpack.c.bf16 %v150, %v150
    %153 = vst [vmem:[#allocation8] sm:$0xf] %v152
    %v154 = vld [vmem:[#allocation2] sm:$0xff]
    %s155 = scalar_lea.vmem [#allocation3], 8
    %v156 = vld [vmem:[%s155] sm:$0xff]
    %v157 = vpack.c.bf16 %v154, %v154
    %v158 = vld [vmem:[#allocation6] sm:$0xf]
    %v159 = vld [vmem:[#allocation6 + $0x4] sm:$0xf]
    %v160 = vld [vmem:[#allocation6 + $0x8] sm:$0xf]
    %v161 = vld [vmem:[#allocation6 + $0xc] sm:$0xf]
    %v162 = vld [vmem:[#allocation6 + $0x10] sm:$0xf]
    %v163 = vld [vmem:[#allocation6 + $0x14] sm:$0xf]
    %v164 = vld [vmem:[#allocation6 + $0x18] sm:$0xf]
    %v165 = vld [vmem:[#allocation6 + $0x1c] sm:$0xf]
    %v166 = vld [vmem:[#allocation6 + $0x20] sm:$0xf]
    %v167 = vld [vmem:[#allocation6 + $0x24] sm:$0xf]
    %v168 = vld [vmem:[#allocation6 + $0x28] sm:$0xf]
    %v169 = vld [vmem:[#allocation6 + $0x2c] sm:$0xf]
    %v170 = vld [vmem:[#allocation6 + $0x30] sm:$0xf]
    %v171 = vld [vmem:[#allocation6 + $0x34] sm:$0xf]
    %v172 = vld [vmem:[#allocation6 + $0x38] sm:$0xf]
    %v173 = vld [vmem:[#allocation6 + $0x3c] sm:$0xf]
    %v190 = vunpack.c.l.b16 %v158
    %v191 = vunpack.c.l.b16 %v159
    %v192 = vunpack.c.l.b16 %v160
    %v193 = vunpack.c.l.b16 %v161
    %v194 = vunpack.c.l.b16 %v162
    %v195 = vunpack.c.l.b16 %v163
    %v196 = vunpack.c.l.b16 %v164
    %v197 = vunpack.c.l.b16 %v165
    %v198 = vunpack.c.l.b16 %v166
    %v199 = vunpack.c.l.b16 %v167
    %v200 = vunpack.c.l.b16 %v168
    %v201 = vunpack.c.l.b16 %v169
    %v202 = vunpack.c.l.b16 %v170
    %v203 = vunpack.c.l.b16 %v171
    %v204 = vunpack.c.l.b16 %v172
    %v205 = vunpack.c.l.b16 %v173
    %v206 = vpack.c.b16 %v191, %v190
    %v207 = vpack.c.b16 %v193, %v192
    %v208 = vpack.c.b16 %v195, %v194
    %v209 = vpack.c.b16 %v197, %v196
    %v210 = vpack.c.b16 %v199, %v198
    %v211 = vpack.c.b16 %v201, %v200
    %v212 = vpack.c.b16 %v203, %v202
    %v213 = vpack.c.b16 %v205, %v204
    %222 = vmatprep.subr.bf16.mxu0 0
    %223 = vmatpush1.bf16.msra.mxu0 %v206
    %224 = vmatprep.subr.bf16.mxu0 0
    %225 = vmatpush1.bf16.msra.mxu0 %v207
    %226 = vmatprep.subr.bf16.mxu0 0
    %227 = vmatpush1.bf16.msra.mxu0 %v208
    %228 = vmatprep.subr.bf16.mxu0 0
    %229 = vmatpush1.bf16.msra.mxu0 %v209
    %230 = vmatprep.subr.bf16.mxu0 0
    %231 = vmatpush1.bf16.msra.mxu0 %v210
    %232 = vmatprep.subr.bf16.mxu0 0
    %233 = vmatpush1.bf16.msra.mxu0 %v211
    %234 = vmatprep.subr.bf16.mxu0 0
    %235 = vmatpush1.bf16.msra.mxu0 %v212
    %236 = vmatprep.subr.bf16.mxu0 0
    %237 = vmatpush1.bf16.msra.mxu0 %v213
    %238 = vmatprep.subr.bf16.mxu0 0
    %239 = vmatpush1.bf16.msra.mxu0 0
    %240 = vmatprep.subr.bf16.mxu0 0
    %241 = vmatpush1.bf16.msra.mxu0 0
    %242 = vmatprep.subr.bf16.mxu0 0
    %243 = vmatpush1.bf16.msra.mxu0 0
    %244 = vmatprep.subr.bf16.mxu0 0
    %245 = vmatpush1.bf16.msra.mxu0 0
    %246 = vmatprep.subr.bf16.mxu0 0
    %247 = vmatpush1.bf16.msra.mxu0 0
    %248 = vmatprep.subr.bf16.mxu0 0
    %249 = vmatpush1.bf16.msra.mxu0 0
    %250 = vmatprep.subr.bf16.mxu0 0
    %251 = vmatpush1.bf16.msra.mxu0 0
    %252 = vmatprep.subr.bf16.mxu0 0
    %253 = vmatpush1.bf16.msra.mxu0 0
    %254 = vmatprep.mubr.bf16.mxu0 0
    %255 = vmatmul.mubr.bf16.gmra.mrb[0].mxu0 %v157
    %v256 = vpop.f32.mrb[0].mxu0
    %v257 = vadd.f32 0.0, %v256
    %v258 = vpop.f32.mrb[0].mxu0
    %v259 = vpop.f32.mrb[0].mxu0
    %v260 = vpop.f32.mrb[0].mxu0
    %261 = vdwg.mxu0
    %v262 = vadd.f32 %v156, %v257
    %v263 = vtanh.pop %v262
    %264 = vst [vmem:[#allocation2] sm:$0xff] %v263
    %v265 = vpack.c.bf16 %v263, %v263
    %s266 = scalar_lea.vmem [#allocation8], 4
    %267 = vst [vmem:[%s266] sm:$0xf] %v265
    %v268 = vld [vmem:[#allocation2] sm:$0xff]
    %s269 = scalar_lea.vmem [#allocation3], 16
    %v270 = vld [vmem:[%s269] sm:$0xff]
    %v271 = vpack.c.bf16 %v268, %v268
    %v272 = vld [vmem:[#allocation6] sm:$0xf]
    %v273 = vld [vmem:[#allocation6 + $0x4] sm:$0xf]
    %v274 = vld [vmem:[#allocation6 + $0x8] sm:$0xf]
    %v275 = vld [vmem:[#allocation6 + $0xc] sm:$0xf]
    %v276 = vld [vmem:[#allocation6 + $0x10] sm:$0xf]
    %v277 = vld [vmem:[#allocation6 + $0x14] sm:$0xf]
    %v278 = vld [vmem:[#allocation6 + $0x18] sm:$0xf]
    %v279 = vld [vmem:[#allocation6 + $0x1c] sm:$0xf]
    %v280 = vld [vmem:[#allocation6 + $0x20] sm:$0xf]
    %v281 = vld [vmem:[#allocation6 + $0x24] sm:$0xf]
    %v282 = vld [vmem:[#allocation6 + $0x28] sm:$0xf]
    %v283 = vld [vmem:[#allocation6 + $0x2c] sm:$0xf]
    %v284 = vld [vmem:[#allocation6 + $0x30] sm:$0xf]
    %v285 = vld [vmem:[#allocation6 + $0x34] sm:$0xf]
    %v286 = vld [vmem:[#allocation6 + $0x38] sm:$0xf]
    %v287 = vld [vmem:[#allocation6 + $0x3c] sm:$0xf]
    %v304 = vunpack.c.l.b16 %v272
    %v305 = vunpack.c.l.b16 %v273
    %v306 = vunpack.c.l.b16 %v274
    %v307 = vunpack.c.l.b16 %v275
    %v308 = vunpack.c.l.b16 %v276
    %v309 = vunpack.c.l.b16 %v277
    %v310 = vunpack.c.l.b16 %v278
    %v311 = vunpack.c.l.b16 %v279
    %v312 = vunpack.c.l.b16 %v280
    %v313 = vunpack.c.l.b16 %v281
    %v314 = vunpack.c.l.b16 %v282
    %v315 = vunpack.c.l.b16 %v283
    %v316 = vunpack.c.l.b16 %v284
    %v317 = vunpack.c.l.b16 %v285
    %v318 = vunpack.c.l.b16 %v286
    %v319 = vunpack.c.l.b16 %v287
    %v320 = vpack.c.b16 %v305, %v304
    %v321 = vpack.c.b16 %v307, %v306
    %v322 = vpack.c.b16 %v309, %v308
    %v323 = vpack.c.b16 %v311, %v310
    %v324 = vpack.c.b16 %v313, %v312
    %v325 = vpack.c.b16 %v315, %v314
    %v326 = vpack.c.b16 %v317, %v316
    %v327 = vpack.c.b16 %v319, %v318
    %336 = vmatprep.subr.bf16.mxu0 0
    %337 = vmatpush1.bf16.msra.mxu0 %v320
    %338 = vmatprep.subr.bf16.mxu0 0
    %339 = vmatpush1.bf16.msra.mxu0 %v321
    %340 = vmatprep.subr.bf16.mxu0 0
    %341 = vmatpush1.bf16.msra.mxu0 %v322
    %342 = vmatprep.subr.bf16.mxu0 0
    %343 = vmatpush1.bf16.msra.mxu0 %v323
    %344 = vmatprep.subr.bf16.mxu0 0
    %345 = vmatpush1.bf16.msra.mxu0 %v324
    %346 = vmatprep.subr.bf16.mxu0 0
    %347 = vmatpush1.bf16.msra.mxu0 %v325
    %348 = vmatprep.subr.bf16.mxu0 0
    %349 = vmatpush1.bf16.msra.mxu0 %v326
    %350 = vmatprep.subr.bf16.mxu0 0
    %351 = vmatpush1.bf16.msra.mxu0 %v327
    %352 = vmatprep.subr.bf16.mxu0 0
    %353 = vmatpush1.bf16.msra.mxu0 0
    %354 = vmatprep.subr.bf16.mxu0 0
    %355 = vmatpush1.bf16.msra.mxu0 0
    %356 = vmatprep.subr.bf16.mxu0 0
    %357 = vmatpush1.bf16.msra.mxu0 0
    %358 = vmatprep.subr.bf16.mxu0 0
    %359 = vmatpush1.bf16.msra.mxu0 0
    %360 = vmatprep.subr.bf16.mxu0 0
    %361 = vmatpush1.bf16.msra.mxu0 0
    %362 = vmatprep.subr.bf16.mxu0 0
    %363 = vmatpush1.bf16.msra.mxu0 0
    %364 = vmatprep.subr.bf16.mxu0 0
    %365 = vmatpush1.bf16.msra.mxu0 0
    %366 = vmatprep.subr.bf16.mxu0 0
    %367 = vmatpush1.bf16.msra.mxu0 0
    %368 = vmatprep.mubr.bf16.mxu0 0
    %369 = vmatmul.mubr.bf16.gmra.mrb[0].mxu0 %v271
    %v370 = vpop.f32.mrb[0].mxu0
    %v371 = vadd.f32 0.0, %v370
    %v372 = vpop.f32.mrb[0].mxu0
    %v373 = vpop.f32.mrb[0].mxu0
    %v374 = vpop.f32.mrb[0].mxu0
    %375 = vdwg.mxu0
    %v376 = vadd.f32 %v270, %v371
    %v377 = vtanh.pop %v376
    %378 = vst [vmem:[#allocation2] sm:$0xff] %v377
    %v379 = vpack.c.bf16 %v377, %v377
    %s380 = scalar_lea.vmem [#allocation8], 8
    %381 = vst [vmem:[%s380] sm:$0xf] %v379
    %v382 = vld [vmem:[#allocation2] sm:$0xff]
    %s383 = scalar_lea.vmem [#allocation3], 24
    %v384 = vld [vmem:[%s383] sm:$0xff]
    %v385 = vpack.c.bf16 %v382, %v382
    %v386 = vld [vmem:[#allocation6] sm:$0xf]
    %v387 = vld [vmem:[#allocation6 + $0x4] sm:$0xf]
    %v388 = vld [vmem:[#allocation6 + $0x8] sm:$0xf]
    %v389 = vld [vmem:[#allocation6 + $0xc] sm:$0xf]
    %v390 = vld [vmem:[#allocation6 + $0x10] sm:$0xf]
    %v391 = vld [vmem:[#allocation6 + $0x14] sm:$0xf]
    %v392 = vld [vmem:[#allocation6 + $0x18] sm:$0xf]
    %v393 = vld [vmem:[#allocation6 + $0x1c] sm:$0xf]
    %v394 = vld [vmem:[#allocation6 + $0x20] sm:$0xf]
    %v395 = vld [vmem:[#allocation6 + $0x24] sm:$0xf]
    %v396 = vld [vmem:[#allocation6 + $0x28] sm:$0xf]
    %v397 = vld [vmem:[#allocation6 + $0x2c] sm:$0xf]
    %v398 = vld [vmem:[#allocation6 + $0x30] sm:$0xf]
    %v399 = vld [vmem:[#allocation6 + $0x34] sm:$0xf]
    %v400 = vld [vmem:[#allocation6 + $0x38] sm:$0xf]
    %v401 = vld [vmem:[#allocation6 + $0x3c] sm:$0xf]
    %v418 = vunpack.c.l.b16 %v386
    %v419 = vunpack.c.l.b16 %v387
    %v420 = vunpack.c.l.b16 %v388
    %v421 = vunpack.c.l.b16 %v389
    %v422 = vunpack.c.l.b16 %v390
    %v423 = vunpack.c.l.b16 %v391
    %v424 = vunpack.c.l.b16 %v392
    %v425 = vunpack.c.l.b16 %v393
    %v426 = vunpack.c.l.b16 %v394
    %v427 = vunpack.c.l.b16 %v395
    %v428 = vunpack.c.l.b16 %v396
    %v429 = vunpack.c.l.b16 %v397
    %v430 = vunpack.c.l.b16 %v398
    %v431 = vunpack.c.l.b16 %v399
    %v432 = vunpack.c.l.b16 %v400
    %v433 = vunpack.c.l.b16 %v401
    %v434 = vpack.c.b16 %v419, %v418
    %v435 = vpack.c.b16 %v421, %v420
    %v436 = vpack.c.b16 %v423, %v422
    %v437 = vpack.c.b16 %v425, %v424
    %v438 = vpack.c.b16 %v427, %v426
    %v439 = vpack.c.b16 %v429, %v428
    %v440 = vpack.c.b16 %v431, %v430
    %v441 = vpack.c.b16 %v433, %v432
    %450 = vmatprep.subr.bf16.mxu0 0
    %451 = vmatpush1.bf16.msra.mxu0 %v434
    %452 = vmatprep.subr.bf16.mxu0 0
    %453 = vmatpush1.bf16.msra.mxu0 %v435
    %454 = vmatprep.subr.bf16.mxu0 0
    %455 = vmatpush1.bf16.msra.mxu0 %v436
    %456 = vmatprep.subr.bf16.mxu0 0
    %457 = vmatpush1.bf16.msra.mxu0 %v437
    %458 = vmatprep.subr.bf16.mxu0 0
    %459 = vmatpush1.bf16.msra.mxu0 %v438
    %460 = vmatprep.subr.bf16.mxu0 0
    %461 = vmatpush1.bf16.msra.mxu0 %v439
    %462 = vmatprep.subr.bf16.mxu0 0
    %463 = vmatpush1.bf16.msra.mxu0 %v440
    %464 = vmatprep.subr.bf16.mxu0 0
    %465 = vmatpush1.bf16.msra.mxu0 %v441
    %466 = vmatprep.subr.bf16.mxu0 0
    %467 = vmatpush1.bf16.msra.mxu0 0
    %468 = vmatprep.subr.bf16.mxu0 0
    %469 = vmatpush1.bf16.msra.mxu0 0
    %470 = vmatprep.subr.bf16.mxu0 0
    %471 = vmatpush1.bf16.msra.mxu0 0
    %472 = vmatprep.subr.bf16.mxu0 0
    %473 = vmatpush1.bf16.msra.mxu0 0
    %474 = vmatprep.subr.bf16.mxu0 0
    %475 = vmatpush1.bf16.msra.mxu0 0
    %476 = vmatprep.subr.bf16.mxu0 0
    %477 = vmatpush1.bf16.msra.mxu0 0
    %478 = vmatprep.subr.bf16.mxu0 0
    %479 = vmatpush1.bf16.msra.mxu0 0
    %480 = vmatprep.subr.bf16.mxu0 0
    %481 = vmatpush1.bf16.msra.mxu0 0
    %482 = vmatprep.mubr.bf16.mxu0 0
    %483 = vmatmul.mubr.bf16.gmra.mrb[0].mxu0 %v385
    %v484 = vpop.f32.mrb[0].mxu0
    %v485 = vadd.f32 0.0, %v484
    %v486 = vpop.f32.mrb[0].mxu0
    %v487 = vpop.f32.mrb[0].mxu0
    %v488 = vpop.f32.mrb[0].mxu0
    %489 = vdwg.mxu0
    %v490 = vadd.f32 %v384, %v485
    %v491 = vtanh.pop %v490
    %492 = vst [vmem:[#allocation2] sm:$0xff] %v491
    %v493 = vpack.c.bf16 %v491, %v491
    %s494 = scalar_lea.vmem [#allocation8], 12
    %495 = vst [vmem:[%s494] sm:$0xf] %v493
    %v496 = vld [vmem:[#allocation2] sm:$0xff]
    %s497 = scalar_lea.vmem [#allocation3], 32
    %v498 = vld [vmem:[%s497] sm:$0xff]
    %v499 = vpack.c.bf16 %v496, %v496
    %v500 = vld [vmem:[#allocation6] sm:$0xf]
    %v501 = vld [vmem:[#allocation6 + $0x4] sm:$0xf]
    %v502 = vld [vmem:[#allocation6 + $0x8] sm:$0xf]
    %v503 = vld [vmem:[#allocation6 + $0xc] sm:$0xf]
    %v504 = vld [vmem:[#allocation6 + $0x10] sm:$0xf]
    %v505 = vld [vmem:[#allocation6 + $0x14] sm:$0xf]
    %v506 = vld [vmem:[#allocation6 + $0x18] sm:$0xf]
    %v507 = vld [vmem:[#allocation6 + $0x1c] sm:$0xf]
    %v508 = vld [vmem:[#allocation6 + $0x20] sm:$0xf]
    %v509 = vld [vmem:[#allocation6 + $0x24] sm:$0xf]
    %v510 = vld [vmem:[#allocation6 + $0x28] sm:$0xf]
    %v511 = vld [vmem:[#allocation6 + $0x2c] sm:$0xf]
    %v512 = vld [vmem:[#allocation6 + $0x30] sm:$0xf]
    %v513 = vld [vmem:[#allocation6 + $0x34] sm:$0xf]
    %v514 = vld [vmem:[#allocation6 + $0x38] sm:$0xf]
    %v515 = vld [vmem:[#allocation6 + $0x3c] sm:$0xf]
    %v532 = vunpack.c.l.b16 %v500
    %v533 = vunpack.c.l.b16 %v501
    %v534 = vunpack.c.l.b16 %v502
    %v535 = vunpack.c.l.b16 %v503
    %v536 = vunpack.c.l.b16 %v504
    %v537 = vunpack.c.l.b16 %v505
    %v538 = vunpack.c.l.b16 %v506
    %v539 = vunpack.c.l.b16 %v507
    %v540 = vunpack.c.l.b16 %v508
    %v541 = vunpack.c.l.b16 %v509
    %v542 = vunpack.c.l.b16 %v510
    %v543 = vunpack.c.l.b16 %v511
    %v544 = vunpack.c.l.b16 %v512
    %v545 = vunpack.c.l.b16 %v513
    %v546 = vunpack.c.l.b16 %v514
    %v547 = vunpack.c.l.b16 %v515
    %v548 = vpack.c.b16 %v533, %v532
    %v549 = vpack.c.b16 %v535, %v534
    %v550 = vpack.c.b16 %v537, %v536
    %v551 = vpack.c.b16 %v539, %v538
    %v552 = vpack.c.b16 %v541, %v540
    %v553 = vpack.c.b16 %v543, %v542
    %v554 = vpack.c.b16 %v545, %v544
    %v555 = vpack.c.b16 %v547, %v546
    %564 = vmatprep.subr.bf16.mxu0 0
    %565 = vmatpush1.bf16.msra.mxu0 %v548
    %566 = vmatprep.subr.bf16.mxu0 0
    %567 = vmatpush1.bf16.msra.mxu0 %v549
    %568 = vmatprep.subr.bf16.mxu0 0
    %569 = vmatpush1.bf16.msra.mxu0 %v550
    %570 = vmatprep.subr.bf16.mxu0 0
    %571 = vmatpush1.bf16.msra.mxu0 %v551
    %572 = vmatprep.subr.bf16.mxu0 0
    %573 = vmatpush1.bf16.msra.mxu0 %v552
    %574 = vmatprep.subr.bf16.mxu0 0
    %575 = vmatpush1.bf16.msra.mxu0 %v553
    %576 = vmatprep.subr.bf16.mxu0 0
    %577 = vmatpush1.bf16.msra.mxu0 %v554
    %578 = vmatprep.subr.bf16.mxu0 0
    %579 = vmatpush1.bf16.msra.mxu0 %v555
    %580 = vmatprep.subr.bf16.mxu0 0
    %581 = vmatpush1.bf16.msra.mxu0 0
    %582 = vmatprep.subr.bf16.mxu0 0
    %583 = vmatpush1.bf16.msra.mxu0 0
    %584 = vmatprep.subr.bf16.mxu0 0
    %585 = vmatpush1.bf16.msra.mxu0 0
    %586 = vmatprep.subr.bf16.mxu0 0
    %587 = vmatpush1.bf16.msra.mxu0 0
    %588 = vmatprep.subr.bf16.mxu0 0
    %589 = vmatpush1.bf16.msra.mxu0 0
    %590 = vmatprep.subr.bf16.mxu0 0
    %591 = vmatpush1.bf16.msra.mxu0 0
    %592 = vmatprep.subr.bf16.mxu0 0
    %593 = vmatpush1.bf16.msra.mxu0 0
    %594 = vmatprep.subr.bf16.mxu0 0
    %595 = vmatpush1.bf16.msra.mxu0 0
    %596 = vmatprep.mubr.bf16.mxu0 0
    %597 = vmatmul.mubr.bf16.gmra.mrb[0].mxu0 %v499
    %v598 = vpop.f32.mrb[0].mxu0
    %v599 = vadd.f32 0.0, %v598
    %v600 = vpop.f32.mrb[0].mxu0
    %v601 = vpop.f32.mrb[0].mxu0
    %v602 = vpop.f32.mrb[0].mxu0
    %603 = vdwg.mxu0
    %v604 = vadd.f32 %v498, %v599
    %v605 = vtanh.pop %v604
    %606 = vst [vmem:[#allocation2] sm:$0xff] %v605
    %v607 = vpack.c.bf16 %v605, %v605
    %s608 = scalar_lea.vmem [#allocation8], 16
    %609 = vst [vmem:[%s608] sm:$0xf] %v607
    %v610 = vld [vmem:[#allocation2] sm:$0xff]
    %s611 = scalar_lea.vmem [#allocation3], 40
    %v612 = vld [vmem:[%s611] sm:$0xff]
    %v613 = vpack.c.bf16 %v610, %v610
    %v614 = vld [vmem:[#allocation6] sm:$0xf]
    %v615 = vld [vmem:[#allocation6 + $0x4] sm:$0xf]
    %v616 = vld [vmem:[#allocation6 + $0x8] sm:$0xf]
    %v617 = vld [vmem:[#allocation6 + $0xc] sm:$0xf]
    %v618 = vld [vmem:[#allocation6 + $0x10] sm:$0xf]
    %v619 = vld [vmem:[#allocation6 + $0x14] sm:$0xf]
    %v620 = vld [vmem:[#allocation6 + $0x18] sm:$0xf]
    %v621 = vld [vmem:[#allocation6 + $0x1c] sm:$0xf]
    %v622 = vld [vmem:[#allocation6 + $0x20] sm:$0xf]
    %v623 = vld [vmem:[#allocation6 + $0x24] sm:$0xf]
    %v624 = vld [vmem:[#allocation6 + $0x28] sm:$0xf]
    %v625 = vld [vmem:[#allocation6 + $0x2c] sm:$0xf]
    %v626 = vld [vmem:[#allocation6 + $0x30] sm:$0xf]
    %v627 = vld [vmem:[#allocation6 + $0x34] sm:$0xf]
    %v628 = vld [vmem:[#allocation6 + $0x38] sm:$0xf]
    %v629 = vld [vmem:[#allocation6 + $0x3c] sm:$0xf]
    %v646 = vunpack.c.l.b16 %v614
    %v647 = vunpack.c.l.b16 %v615
    %v648 = vunpack.c.l.b16 %v616
    %v649 = vunpack.c.l.b16 %v617
    %v650 = vunpack.c.l.b16 %v618
    %v651 = vunpack.c.l.b16 %v619
    %v652 = vunpack.c.l.b16 %v620
    %v653 = vunpack.c.l.b16 %v621
    %v654 = vunpack.c.l.b16 %v622
    %v655 = vunpack.c.l.b16 %v623
    %v656 = vunpack.c.l.b16 %v624
    %v657 = vunpack.c.l.b16 %v625
    %v658 = vunpack.c.l.b16 %v626
    %v659 = vunpack.c.l.b16 %v627
    %v660 = vunpack.c.l.b16 %v628
    %v661 = vunpack.c.l.b16 %v629
    %v662 = vpack.c.b16 %v647, %v646
    %v663 = vpack.c.b16 %v649, %v648
    %v664 = vpack.c.b16 %v651, %v650
    %v665 = vpack.c.b16 %v653, %v652
    %v666 = vpack.c.b16 %v655, %v654
    %v667 = vpack.c.b16 %v657, %v656
    %v668 = vpack.c.b16 %v659, %v658
    %v669 = vpack.c.b16 %v661, %v660
    %678 = vmatprep.subr.bf16.mxu0 0
    %679 = vmatpush1.bf16.msra.mxu0 %v662
    %680 = vmatprep.subr.bf16.mxu0 0
    %681 = vmatpush1.bf16.msra.mxu0 %v663
    %682 = vmatprep.subr.bf16.mxu0 0
    %683 = vmatpush1.bf16.msra.mxu0 %v664
    %684 = vmatprep.subr.bf16.mxu0 0
    %685 = vmatpush1.bf16.msra.mxu0 %v665
    %686 = vmatprep.subr.bf16.mxu0 0
    %687 = vmatpush1.bf16.msra.mxu0 %v666
    %688 = vmatprep.subr.bf16.mxu0 0
    %689 = vmatpush1.bf16.msra.mxu0 %v667
    %690 = vmatprep.subr.bf16.mxu0 0
    %691 = vmatpush1.bf16.msra.mxu0 %v668
    %692 = vmatprep.subr.bf16.mxu0 0
    %693 = vmatpush1.bf16.msra.mxu0 %v669
    %694 = vmatprep.subr.bf16.mxu0 0
    %695 = vmatpush1.bf16.msra.mxu0 0
    %696 = vmatprep.subr.bf16.mxu0 0
    %697 = vmatpush1.bf16.msra.mxu0 0
    %698 = vmatprep.subr.bf16.mxu0 0
    %699 = vmatpush1.bf16.msra.mxu0 0
    %700 = vmatprep.subr.bf16.mxu0 0
    %701 = vmatpush1.bf16.msra.mxu0 0
    %702 = vmatprep.subr.bf16.mxu0 0
    %703 = vmatpush1.bf16.msra.mxu0 0
    %704 = vmatprep.subr.bf16.mxu0 0
    %705 = vmatpush1.bf16.msra.mxu0 0
    %706 = vmatprep.subr.bf16.mxu0 0
    %707 = vmatpush1.bf16.msra.mxu0 0
    %708 = vmatprep.subr.bf16.mxu0 0
    %709 = vmatpush1.bf16.msra.mxu0 0
    %710 = vmatprep.mubr.bf16.mxu0 0
    %711 = vmatmul.mubr.bf16.gmra.mrb[0].mxu0 %v613
    %v712 = vpop.f32.mrb[0].mxu0
    %v713 = vadd.f32 0.0, %v712
    %v714 = vpop.f32.mrb[0].mxu0
    %v715 = vpop.f32.mrb[0].mxu0
    %v716 = vpop.f32.mrb[0].mxu0
    %717 = vdwg.mxu0
    %v718 = vadd.f32 %v612, %v713
    %v719 = vtanh.pop %v718
    %720 = vst [vmem:[#allocation2] sm:$0xff] %v719
    %v721 = vpack.c.bf16 %v719, %v719
    %s722 = scalar_lea.vmem [#allocation8], 20
    %723 = vst [vmem:[%s722] sm:$0xf] %v721
    %v724 = vld [vmem:[#allocation2] sm:$0xff]
    %s725 = scalar_lea.vmem [#allocation3], 48
    %v726 = vld [vmem:[%s725] sm:$0xff]
    %v727 = vpack.c.bf16 %v724, %v724
    %v728 = vld [vmem:[#allocation6] sm:$0xf]
    %v729 = vld [vmem:[#allocation6 + $0x4] sm:$0xf]
    %v730 = vld [vmem:[#allocation6 + $0x8] sm:$0xf]
    %v731 = vld [vmem:[#allocation6 + $0xc] sm:$0xf]
    %v732 = vld [vmem:[#allocation6 + $0x10] sm:$0xf]
    %v733 = vld [vmem:[#allocation6 + $0x14] sm:$0xf]
    %v734 = vld [vmem:[#allocation6 + $0x18] sm:$0xf]
    %v735 = vld [vmem:[#allocation6 + $0x1c] sm:$0xf]
    %v736 = vld [vmem:[#allocation6 + $0x20] sm:$0xf]
    %v737 = vld [vmem:[#allocation6 + $0x24] sm:$0xf]
    %v738 = vld [vmem:[#allocation6 + $0x28] sm:$0xf]
    %v739 = vld [vmem:[#allocation6 + $0x2c] sm:$0xf]
    %v740 = vld [vmem:[#allocation6 + $0x30] sm:$0xf]
    %v741 = vld [vmem:[#allocation6 + $0x34] sm:$0xf]
    %v742 = vld [vmem:[#allocation6 + $0x38] sm:$0xf]
    %v743 = vld [vmem:[#allocation6 + $0x3c] sm:$0xf]
    %v760 = vunpack.c.l.b16 %v728
    %v761 = vunpack.c.l.b16 %v729
    %v762 = vunpack.c.l.b16 %v730
    %v763 = vunpack.c.l.b16 %v731
    %v764 = vunpack.c.l.b16 %v732
    %v765 = vunpack.c.l.b16 %v733
    %v766 = vunpack.c.l.b16 %v734
    %v767 = vunpack.c.l.b16 %v735
    %v768 = vunpack.c.l.b16 %v736
    %v769 = vunpack.c.l.b16 %v737
    %v770 = vunpack.c.l.b16 %v738
    %v771 = vunpack.c.l.b16 %v739
    %v772 = vunpack.c.l.b16 %v740
    %v773 = vunpack.c.l.b16 %v741
    %v774 = vunpack.c.l.b16 %v742
    %v775 = vunpack.c.l.b16 %v743
    %v776 = vpack.c.b16 %v761, %v760
    %v777 = vpack.c.b16 %v763, %v762
    %v778 = vpack.c.b16 %v765, %v764
    %v779 = vpack.c.b16 %v767, %v766
    %v780 = vpack.c.b16 %v769, %v768
    %v781 = vpack.c.b16 %v771, %v770
    %v782 = vpack.c.b16 %v773, %v772
    %v783 = vpack.c.b16 %v775, %v774
    %792 = vmatprep.subr.bf16.mxu0 0
    %793 = vmatpush1.bf16.msra.mxu0 %v776
    %794 = vmatprep.subr.bf16.mxu0 0
    %795 = vmatpush1.bf16.msra.mxu0 %v777
    %796 = vmatprep.subr.bf16.mxu0 0
    %797 = vmatpush1.bf16.msra.mxu0 %v778
    %798 = vmatprep.subr.bf16.mxu0 0
    %799 = vmatpush1.bf16.msra.mxu0 %v779
    %800 = vmatprep.subr.bf16.mxu0 0
    %801 = vmatpush1.bf16.msra.mxu0 %v780
    %802 = vmatprep.subr.bf16.mxu0 0
    %803 = vmatpush1.bf16.msra.mxu0 %v781
    %804 = vmatprep.subr.bf16.mxu0 0
    %805 = vmatpush1.bf16.msra.mxu0 %v782
    %806 = vmatprep.subr.bf16.mxu0 0
    %807 = vmatpush1.bf16.msra.mxu0 %v783
    %808 = vmatprep.subr.bf16.mxu0 0
    %809 = vmatpush1.bf16.msra.mxu0 0
    %810 = vmatprep.subr.bf16.mxu0 0
    %811 = vmatpush1.bf16.msra.mxu0 0
    %812 = vmatprep.subr.bf16.mxu0 0
    %813 = vmatpush1.bf16.msra.mxu0 0
    %814 = vmatprep.subr.bf16.mxu0 0
    %815 = vmatpush1.bf16.msra.mxu0 0
    %816 = vmatprep.subr.bf16.mxu0 0
    %817 = vmatpush1.bf16.msra.mxu0 0
    %818 = vmatprep.subr.bf16.mxu0 0
    %819 = vmatpush1.bf16.msra.mxu0 0
    %820 = vmatprep.subr.bf16.mxu0 0
    %821 = vmatpush1.bf16.msra.mxu0 0
    %822 = vmatprep.subr.bf16.mxu0 0
    %823 = vmatpush1.bf16.msra.mxu0 0
    %824 = vmatprep.mubr.bf16.mxu0 0
    %825 = vmatmul.mubr.bf16.gmra.mrb[0].mxu0 %v727
    %v826 = vpop.f32.mrb[0].mxu0
    %v827 = vadd.f32 0.0, %v826
    %v828 = vpop.f32.mrb[0].mxu0
    %v829 = vpop.f32.mrb[0].mxu0
    %v830 = vpop.f32.mrb[0].mxu0
    %831 = vdwg.mxu0
    %v832 = vadd.f32 %v726, %v827
    %v833 = vtanh.pop %v832
    %834 = vst [vmem:[#allocation2] sm:$0xff] %v833
    %v835 = vpack.c.bf16 %v833, %v833
    %s836 = scalar_lea.vmem [#allocation8], 24
    %837 = vst [vmem:[%s836] sm:$0xf] %v835
    %v838 = vld [vmem:[#allocation2] sm:$0xff]
    %s839 = scalar_lea.vmem [#allocation3], 56
    %v840 = vld [vmem:[%s839] sm:$0xff]
    %v841 = vpack.c.bf16 %v838, %v838
    %v842 = vld [vmem:[#allocation6] sm:$0xf]
    %v843 = vld [vmem:[#allocation6 + $0x4] sm:$0xf]
    %v844 = vld [vmem:[#allocation6 + $0x8] sm:$0xf]
    %v845 = vld [vmem:[#allocation6 + $0xc] sm:$0xf]
    %v846 = vld [vmem:[#allocation6 + $0x10] sm:$0xf]
    %v847 = vld [vmem:[#allocation6 + $0x14] sm:$0xf]
    %v848 = vld [vmem:[#allocation6 + $0x18] sm:$0xf]
    %v849 = vld [vmem:[#allocation6 + $0x1c] sm:$0xf]
    %v850 = vld [vmem:[#allocation6 + $0x20] sm:$0xf]
    %v851 = vld [vmem:[#allocation6 + $0x24] sm:$0xf]
    %v852 = vld [vmem:[#allocation6 + $0x28] sm:$0xf]
    %v853 = vld [vmem:[#allocation6 + $0x2c] sm:$0xf]
    %v854 = vld [vmem:[#allocation6 + $0x30] sm:$0xf]
    %v855 = vld [vmem:[#allocation6 + $0x34] sm:$0xf]
    %v856 = vld [vmem:[#allocation6 + $0x38] sm:$0xf]
    %v857 = vld [vmem:[#allocation6 + $0x3c] sm:$0xf]
    %v874 = vunpack.c.l.b16 %v842
    %v875 = vunpack.c.l.b16 %v843
    %v876 = vunpack.c.l.b16 %v844
    %v877 = vunpack.c.l.b16 %v845
    %v878 = vunpack.c.l.b16 %v846
    %v879 = vunpack.c.l.b16 %v847
    %v880 = vunpack.c.l.b16 %v848
    %v881 = vunpack.c.l.b16 %v849
    %v882 = vunpack.c.l.b16 %v850
    %v883 = vunpack.c.l.b16 %v851
    %v884 = vunpack.c.l.b16 %v852
    %v885 = vunpack.c.l.b16 %v853
    %v886 = vunpack.c.l.b16 %v854
    %v887 = vunpack.c.l.b16 %v855
    %v888 = vunpack.c.l.b16 %v856
    %v889 = vunpack.c.l.b16 %v857
    %v890 = vpack.c.b16 %v875, %v874
    %v891 = vpack.c.b16 %v877, %v876
    %v892 = vpack.c.b16 %v879, %v878
    %v893 = vpack.c.b16 %v881, %v880
    %v894 = vpack.c.b16 %v883, %v882
    %v895 = vpack.c.b16 %v885, %v884
    %v896 = vpack.c.b16 %v887, %v886
    %v897 = vpack.c.b16 %v889, %v888
    %906 = vmatprep.subr.bf16.mxu0 0
    %907 = vmatpush1.bf16.msra.mxu0 %v890
    %908 = vmatprep.subr.bf16.mxu0 0
    %909 = vmatpush1.bf16.msra.mxu0 %v891
    %910 = vmatprep.subr.bf16.mxu0 0
    %911 = vmatpush1.bf16.msra.mxu0 %v892
    %912 = vmatprep.subr.bf16.mxu0 0
    %913 = vmatpush1.bf16.msra.mxu0 %v893
    %914 = vmatprep.subr.bf16.mxu0 0
    %915 = vmatpush1.bf16.msra.mxu0 %v894
    %916 = vmatprep.subr.bf16.mxu0 0
    %917 = vmatpush1.bf16.msra.mxu0 %v895
    %918 = vmatprep.subr.bf16.mxu0 0
    %919 = vmatpush1.bf16.msra.mxu0 %v896
    %920 = vmatprep.subr.bf16.mxu0 0
    %921 = vmatpush1.bf16.msra.mxu0 %v897
    %922 = vmatprep.subr.bf16.mxu0 0
    %923 = vmatpush1.bf16.msra.mxu0 0
    %924 = vmatprep.subr.bf16.mxu0 0
    %925 = vmatpush1.bf16.msra.mxu0 0
    %926 = vmatprep.subr.bf16.mxu0 0
    %927 = vmatpush1.bf16.msra.mxu0 0
    %928 = vmatprep.subr.bf16.mxu0 0
    %929 = vmatpush1.bf16.msra.mxu0 0
    %930 = vmatprep.subr.bf16.mxu0 0
    %931 = vmatpush1.bf16.msra.mxu0 0
    %932 = vmatprep.subr.bf16.mxu0 0
    %933 = vmatpush1.bf16.msra.mxu0 0
    %934 = vmatprep.subr.bf16.mxu0 0
    %935 = vmatpush1.bf16.msra.mxu0 0
    %936 = vmatprep.subr.bf16.mxu0 0
    %937 = vmatpush1.bf16.msra.mxu0 0
    %938 = vmatprep.mubr.bf16.mxu0 0
    %939 = vmatmul.mubr.bf16.gmra.mrb[0].mxu0 %v841
    %v940 = vpop.f32.mrb[0].mxu0
    %v941 = vadd.f32 0.0, %v940
    %v942 = vpop.f32.mrb[0].mxu0
    %v943 = vpop.f32.mrb[0].mxu0
    %v944 = vpop.f32.mrb[0].mxu0
    %945 = vdwg.mxu0
    %v946 = vadd.f32 %v840, %v941
    %v947 = vtanh.pop %v946
    %948 = vst [vmem:[#allocation2] sm:$0xff] %v947
    %v949 = vpack.c.bf16 %v947, %v947
    %s950 = scalar_lea.vmem [#allocation8], 28
    %951 = vst [vmem:[%s950] sm:$0xf] %v949
    // Predicated region
    $region18: #{rnn_model_forward.4} parent=1 // pred_check
      _
    $region19: #{rnn_model_forward.4} parent=1 // pred_check_branch
      %953 = sbr.rel (0) target = $region21
    $region20: #{rnn_model_forward.4} parent=1 // pred_region
      %s955 = ssub.s32 512, 512
      %956 = vsyncadd [#allocation5], %s955
      %s957 = sshll.u32 [#allocation8], 4
      %s958 = int_to_ptr.vmem [resolvable:$true] %s957
      %963 = dma.vmem_to_hbm [thread:$0]  %s958, 512, %s2, [#allocation5], 64, 64, 4
    $region21: #{rnn_model_forward.4} parent=1 // pred_fallthru
      _
    // Predicated region
    $region22: #{rnn_model_forward.4} parent=1 // pred_check
      _
    $region23: #{rnn_model_forward.4} parent=1 // pred_check_branch
      %965 = sbr.rel (0) target = $region25
    $region24: #{rnn_model_forward.4} parent=1 // pred_region
      %966 = dma.done [#allocation5], 512
    $region25: #{rnn_model_forward.4} parent=1 // pred_fallthru
      _
    %967 = vsyncpa [#allocation4], 1
    %968 = vsyncpa [#allocation7], 1
    %969 = vsyncpa [#allocation5], 1

</llo_original>
